<compile_context>
chip_gen: v5e
topology: v5e:2x2
jax: 0.10.0
libtpu: 0.0.40
codegen_flags: <defaults>
</compile_context>

<pallas_src>
import numpy as np
import jax
import jax.numpy as jnp
from jax.experimental import pallas as pl
from jax.experimental.pallas import tpu as pltpu


# Branch configs: (kernel, stride, padding, dilation) — matches the PyTorch module.
_BRANCHES = ((2, 2, 0, 1), (4, 4, 2, 2), (8, 8, 8, 3))
_KKS = tuple(k * k for (k, _, _, _) in _BRANCHES)      # (4, 16, 64) taps per branch
_TAPS = sum(_KKS)                                      # 84
_N_BRANCH_CH = 4                                       # out_channels per conv branch
_N_CH = _N_BRANCH_CH * len(_BRANCHES)                  # 12 concatenated channels
_POOL = 6                                              # AdaptiveAvgPool2d((6, 6))
_FC1, _FC2, _FC3 = 150, 50, 2
_OUT_PAD = 128                                         # fc3 padded to a lane-dense store
_ROW_TILE = 8                                          # batch rows per grid step


def _conv_out(n, k, s, p, d):
    eff = d * (k - 1) + 1
    return (n + 2 * p - eff) // s + 1


def _adaptive_pool_matrix(n_in, n_out):
    """Row-stochastic matrix implementing torch AdaptiveAvgPool1d(n_out)."""
    m = np.zeros((n_out, n_in), np.float32)
    for i in range(n_out):
        s = (i * n_in) // n_out
        e = -(-((i + 1) * n_in) // n_out)  # ceil
        m[i, s:e] = 1.0 / (e - s)
    return m


def _im2col_indices(w, k, s, p, d, h_take, w_take, max_pad):
    """Flat gather indices into the max_pad-padded image for the top-left
    (h_take, w_take) conv outputs. Ordering: (i*w_take + j, p*k + q)."""
    wp = w + 2 * max_pad
    r0 = max_pad - p
    c0 = max_pad - p
    idx = np.empty((h_take, w_take, k, k), np.int32)
    for i in range(h_take):
        for j in range(w_take):
            for pp in range(k):
                for qq in range(k):
                    idx[i, j, pp, qq] = (r0 + i * s + pp * d) * wp + (c0 + j * s + qq * d)
    return idx


# ----------------------------------------------------------------------------
# The single fused kernel: conv branches + relayout + MLP, all operands are
# full-array / row-tiled VMEM blocks, one lane-dense (RT, 128) output store.
# ----------------------------------------------------------------------------
def _fused_kernel(cols_ref, wc_ref, bc_ref, mask_ref, agg_ref,
                  w1_ref, b1_ref, w2_ref, b2_ref, w3_ref, b3_ref, o_ref):
    f32 = jnp.float32
    bf16 = jnp.bfloat16

    # All three conv branches as ONE bf16 matmul: (RT*36, 84) x (84, 432).
    # The weight is the dense per-tap (84, 12) block lane-tiled over the 36
    # spatial positions, so every row carries its conv output replicated
    # across the 36 spatial lane-blocks.  + bias, ReLU (per-branch ReLU).
    t = jnp.dot(cols_ref[...], wc_ref[...], preferred_element_type=f32)
    t = jnp.maximum(t + bc_ref[...], 0.0)                     # (RT*36, 432) f32

    # Relayout (sample*spatial, channel) -> (sample, spatial*channel) with no
    # reshape: keep only each row's own spatial lane-block (0/1 mask), then
    # fold the 36 rows of every sample with a tiny 0/1 matmul.
    t = t * mask_ref[...].astype(f32)
    feat = jnp.dot(agg_ref[...], t, preferred_element_type=f32)   # (RT, 432)

    # Classifier MLP (Dropout = identity at inference); bf16 weights, f32 acc.
    h = jnp.dot(feat.astype(bf16), w1_ref[...], preferred_element_type=f32)
    h = jnp.maximum(h + b1_ref[...], 0.0)                     # (RT, 150)
    h = jnp.dot(h.astype(bf16), w2_ref[...], preferred_element_type=f32)
    h = jnp.maximum(h + b2_ref[...], 0.0)                     # (RT, 50)
    # Final store: full unmasked lane-dense (RT, 128) block.
    o_ref[...] = (jnp.dot(h.astype(bf16), w3_ref[...], preferred_element_type=f32)
                  + b3_ref[...])


# ----------------------------------------------------------------------------
# Weight / constant preparation (once per parameter set, outside the hot path).
# ----------------------------------------------------------------------------
def prepare_kernel_params(params, h, w):
    outs = [(_conv_out(h, k, s, p, d), _conv_out(w, k, s, p, d)) for (k, s, p, d) in _BRANCHES]
    h_take = min(o[0] for o in outs)
    w_take = min(o[1] for o in outs)
    hwc = h_take * w_take
    feat_w = hwc * _N_CH
    max_pad = max(p for (_, _, p, _) in _BRANCHES)

    # AdaptiveAvgPool2d((6,6)) folded into fc1 (identity for a 48x48 input).
    pk = np.kron(_adaptive_pool_matrix(h_take, _POOL),
                 _adaptive_pool_matrix(w_take, _POOL))            # (36, hwc)

    # Gather indices for the two dilated branches only (2x2 branch is a reshape).
    idx_dil = np.concatenate(
        [_im2col_indices(w, k, s, p, d, h_take, w_take, max_pad).reshape(hwc, k * k)
         for (k, s, p, d) in _BRANCHES[1:]], axis=1).reshape(-1)  # (hwc*80,)

    # Dense conv weights: (84, 12) block-diagonal over branches (the only
    # structural zeros left, ~1 KB), then lane-tiled over the hwc positions.
    w_small = np.zeros((_TAPS, _N_CH), np.float32)
    b_small = np.zeros((_N_CH,), np.float32)
    off = 0
    for bi, ((k, _, _, _), wname, bname) in enumerate(
            zip(_BRANCHES, ("w2", "w3", "w5"), ("b2", "b3", "b5"))):
        w_small[off:off + k * k, bi * 4:(bi + 1) * 4] = \
            np.asarray(params[wname], np.float32).reshape(_N_BRANCH_CH, k * k).T
        b_small[bi * 4:(bi + 1) * 4] = np.asarray(params[bname], np.float32)
        off += k * k
    w_conv = np.tile(w_small, (1, hwc))                    # (84, 432)
    b_conv = np.tile(b_small, hwc)[None, :]                # (1, 432)

    # Structural 0/1 relayout constants: spatial-select mask + per-sample fold.
    r = np.arange(_ROW_TILE * hwc)[:, None]
    j = np.arange(feat_w)[None, :]
    mask = ((j // _N_CH) == (r % hwc)).astype(np.float32)  # (RT*hwc, 432)
    bb = np.arange(_ROW_TILE)[:, None]
    agg = ((r.T // hwc) == bb).astype(np.float32)          # (RT, RT*hwc)

    # fc1 with pooling + NCHW-flatten ordering folded into the weights; rows
    # ordered (spatial, channel) to match the in-kernel feature layout.
    w1 = np.asarray(params["fc1_w"], np.float32).reshape(_FC1, _N_CH, _POOL * _POOL)
    w1f = np.einsum("ocp,ps->ocs", w1, pk)                 # (150, 12, hwc)
    w1p = w1f.transpose(2, 1, 0).reshape(feat_w, _FC1)
    b1 = np.asarray(params["fc1_b"], np.float32)[None, :]

    w2f = np.asarray(params["fc2_w"], np.float32).T        # (150, 50)
    b2f = np.asarray(params["fc2_b"], np.float32)[None, :]
    w3f = np.pad(np.asarray(params["fc3_w"], np.float32).T,
                 ((0, 0), (0, _OUT_PAD - _FC3)))           # (50, 128)
    b3f = np.pad(np.asarray(params["fc3_b"], np.float32)[None, :],
                 ((0, 0), (0, _OUT_PAD - _FC3)))

    bf16 = jnp.bfloat16
    return {
        "idx_dil": jnp.asarray(idx_dil, jnp.int32),
        "w_conv": jnp.asarray(w_conv, bf16), "b_conv": jnp.asarray(b_conv),
        "mask": jnp.asarray(mask, bf16), "agg": jnp.asarray(agg, jnp.float32),
        "w1": jnp.asarray(w1p, bf16), "b1": jnp.asarray(b1),
        "w2f": jnp.asarray(w2f, bf16), "b2f": jnp.asarray(b2f),
        "w3f": jnp.asarray(w3f, bf16), "b3f": jnp.asarray(b3f),
    }


# ----------------------------------------------------------------------------
# Forward pass: reshape (2x2 branch) + pad + one gather (dilated branches) in
# JAX, then ONE pallas_call over row tiles of 8.
# ----------------------------------------------------------------------------
def incept_conv_forward(x, kp):
    b, _, h, w = x.shape
    outs = [(_conv_out(h, k, s, p, d), _conv_out(w, k, s, p, d)) for (k, s, p, d) in _BRANCHES]
    h_take = min(o[0] for o in outs)
    w_take = min(o[1] for o in outs)
    hwc = h_take * w_take
    feat_w = hwc * _N_CH
    max_pad = max(p for (_, _, p, _) in _BRANCHES)

    xs = x[:, 0].astype(jnp.float32)
    # 2x2 branch: stride == kernel, no pad/dilation -> im2col is a pure reshape.
    c2 = xs[:, :h_take * 2, :w_take * 2].reshape(b, h_take, 2, w_take, 2)
    c2 = c2.transpose(0, 1, 3, 2, 4).reshape(b, hwc, _KKS[0])
    # Dilated branches: one pad + one gather against a shared index table.
    xp = jnp.pad(xs, ((0, 0), (max_pad, max_pad), (max_pad, max_pad))).reshape(b, -1)
    cdil = jnp.take(xp, kp["idx_dil"], axis=1).reshape(b, hwc, _TAPS - _KKS[0])
    cols = jnp.concatenate([c2, cdil], axis=2)                       # (B, hwc, 84)

    rows = -(-b // _ROW_TILE) * _ROW_TILE
    cols = jnp.pad(cols, ((0, rows - b), (0, 0), (0, 0)))
    cols = cols.reshape(rows * hwc, _TAPS).astype(jnp.bfloat16)
    n_tiles = rows // _ROW_TILE

    ops = (cols, kp["w_conv"], kp["b_conv"], kp["mask"], kp["agg"],
           kp["w1"], kp["b1"], kp["w2f"], kp["b2f"], kp["w3f"], kp["b3f"])

    flops = 2 * (rows * hwc * _TAPS * feat_w        # branch convs
                 + rows * _ROW_TILE * hwc * feat_w  # fold matmul
                 + rows * feat_w * _FC1
                 + rows * _FC1 * _FC2
                 + rows * _FC2 * _OUT_PAD)
    bytes_acc = int(sum(int(o.size) * o.dtype.itemsize for o in ops)
                    + rows * _OUT_PAD * 4)

    tile_map = lambda i: (i, 0)
    const_map = lambda i: (0, 0)

    out = pl.pallas_call(
        _fused_kernel,
        out_shape=jax.ShapeDtypeStruct((rows, _OUT_PAD), jnp.float32),
        grid=(n_tiles,),
        in_specs=[
            pl.BlockSpec((_ROW_TILE * hwc, _TAPS), tile_map),   # cols (row-tiled)
            pl.BlockSpec(kp["w_conv"].shape, const_map),        # weights fetched once
            pl.BlockSpec(kp["b_conv"].shape, const_map),
            pl.BlockSpec(kp["mask"].shape, const_map),
            pl.BlockSpec(kp["agg"].shape, const_map),
            pl.BlockSpec(kp["w1"].shape, const_map),
            pl.BlockSpec(kp["b1"].shape, const_map),
            pl.BlockSpec(kp["w2f"].shape, const_map),
            pl.BlockSpec(kp["b2f"].shape, const_map),
            pl.BlockSpec(kp["w3f"].shape, const_map),
            pl.BlockSpec(kp["b3f"].shape, const_map),
        ],
        out_specs=pl.BlockSpec((_ROW_TILE, _OUT_PAD), tile_map),
        compiler_params=pltpu.CompilerParams(dimension_semantics=("parallel",)),
        cost_estimate=pl.CostEstimate(flops=flops, transcendentals=0,
                                      bytes_accessed=bytes_acc),
    )(*ops)

    return out[:b, :_FC3]


# ----------------------------------------------------------------------------
# Parameter init (PyTorch-style uniform bounds).
# ----------------------------------------------------------------------------
def init_params(key):
    keys = jax.random.split(key, 12)

    def uinit(k, shape, fan_in):
        bound = 1.0 / np.sqrt(fan_in)
        return jax.random.uniform(k, shape, jnp.float32, -bound, bound)

    return {
        "w2": uinit(keys[0], (4, 1, 2, 2), 1 * 2 * 2),
        "b2": uinit(keys[1], (4,), 1 * 2 * 2),
        "w3": uinit(keys[2], (4, 1, 4, 4), 1 * 4 * 4),
        "b3": uinit(keys[3], (4,), 1 * 4 * 4),
        "w5": uinit(keys[4], (4, 1, 8, 8), 1 * 8 * 8),
        "b5": uinit(keys[5], (4,), 1 * 8 * 8),
        "fc1_w": uinit(keys[6], (150, 12 * 6 * 6), 12 * 6 * 6),
        "fc1_b": uinit(keys[7], (150,), 12 * 6 * 6),
        "fc2_w": uinit(keys[8], (50, 150), 150),
        "fc2_b": uinit(keys[9], (50,), 150),
        "fc3_w": uinit(keys[10], (2, 50), 50),
        "fc3_b": uinit(keys[11], (2,), 50),
    }


if __name__ == "__main__":
    key = jax.random.PRNGKey(0)
    pkey, xkey = jax.random.split(key)
    params = init_params(pkey)

    # B=2, C=1 (module expects single-channel), H=W=48:
    #   block2x2 -> 24x24, block3x3 -> 12x12, block5x5 -> 6x6 ; crop -> 6x6.
    x = jax.random.normal(xkey, (2, 1, 48, 48), jnp.float32)

    kparams = prepare_kernel_params(params, 48, 48)   # one-time weight packing
    fwd = jax.jit(incept_conv_forward)

    out = jax.block_until_ready(fwd(x, kparams))
    assert out.shape == (2, 2), out.shape
    assert bool(jnp.all(jnp.isfinite(out)))
    print("KERNEL_OK")
</pallas_src>

<mosaic_0001>
module attributes {stable_mosaic.version = 11 : i64} {
  func.func @_fused_kernel(%arg0: i32, %arg1: memref<288x84xbf16, #tpu.memory_space<vmem>>, %arg2: memref<84x432xbf16, #tpu.memory_space<vmem>>, %arg3: memref<1x432xf32, #tpu.memory_space<vmem>>, %arg4: memref<288x432xbf16, #tpu.memory_space<vmem>>, %arg5: memref<8x288xf32, #tpu.memory_space<vmem>>, %arg6: memref<432x150xbf16, #tpu.memory_space<vmem>>, %arg7: memref<1x150xf32, #tpu.memory_space<vmem>>, %arg8: memref<150x50xbf16, #tpu.memory_space<vmem>>, %arg9: memref<1x50xf32, #tpu.memory_space<vmem>>, %arg10: memref<50x128xbf16, #tpu.memory_space<vmem>>, %arg11: memref<1x128xf32, #tpu.memory_space<vmem>>, %arg12: memref<8x128xf32, #tpu.memory_space<vmem>>) attributes {dimension_semantics = [#tpu.dimension_semantics<parallel>], iteration_bounds = array<i64: 1>, scalar_prefetch = 0 : i64, scratch_operands = 0 : i64, tpu.core_type = #tpu.core_type<tc>, window_params = [{transform_indices = @transform_0, window_bounds = array<i64: 288, 84>}, {pipeline_mode = #tpu.pipeline_mode<synchronous>, transform_indices = @transform_1, window_bounds = array<i64: 84, 432>}, {pipeline_mode = #tpu.pipeline_mode<synchronous>, transform_indices = @transform_2, window_bounds = array<i64: 1, 432>}, {pipeline_mode = #tpu.pipeline_mode<synchronous>, transform_indices = @transform_3, window_bounds = array<i64: 288, 432>}, {pipeline_mode = #tpu.pipeline_mode<synchronous>, transform_indices = @transform_4, window_bounds = array<i64: 8, 288>}, {pipeline_mode = #tpu.pipeline_mode<synchronous>, transform_indices = @transform_5, window_bounds = array<i64: 432, 150>}, {pipeline_mode = #tpu.pipeline_mode<synchronous>, transform_indices = @transform_6, window_bounds = array<i64: 1, 150>}, {pipeline_mode = #tpu.pipeline_mode<synchronous>, transform_indices = @transform_7, window_bounds = array<i64: 150, 50>}, {pipeline_mode = #tpu.pipeline_mode<synchronous>, transform_indices = @transform_8, window_bounds = array<i64: 1, 50>}, {pipeline_mode = #tpu.pipeline_mode<synchronous>, transform_indices = @transform_9, window_bounds = array<i64: 50, 128>}, {pipeline_mode = #tpu.pipeline_mode<synchronous>, transform_indices = @transform_10, window_bounds = array<i64: 1, 128>}, {transform_indices = @transform_11, window_bounds = array<i64: 8, 128>}]} {
    %c0 = arith.constant 0 : index
    %c0_0 = arith.constant 0 : index
    %0 = vector.load %arg1[%c0, %c0_0] : memref<288x84xbf16, #tpu.memory_space<vmem>>, vector<288x84xbf16>
    %c0_1 = arith.constant 0 : index
    %c0_2 = arith.constant 0 : index
    %1 = vector.load %arg2[%c0_1, %c0_2] : memref<84x432xbf16, #tpu.memory_space<vmem>>, vector<84x432xbf16>
    %cst = arith.constant dense<0.000000e+00> : vector<288x432xf32>
    %2 = tpu.matmul %0, %1, %cst {dimension_numbers = #tpu.dot_dimension_numbers<[1], [0], [0], [1], [0, 0, 1, 1], [], []>} : vector<288x84xbf16>, vector<84x432xbf16>, vector<288x432xf32> -> vector<288x432xf32>
    %c0_3 = arith.constant 0 : index
    %c0_4 = arith.constant 0 : index
    %3 = vector.load %arg3[%c0_3, %c0_4] : memref<1x432xf32, #tpu.memory_space<vmem>>, vector<1x432xf32>
    %4 = vector.broadcast %3 : vector<1x432xf32> to vector<288x432xf32>
    %5 = arith.addf %2, %4 : vector<288x432xf32>
    %cst_5 = arith.constant 0.000000e+00 : f32
    %6 = vector.broadcast %cst_5 : f32 to vector<288x432xf32>
    %7 = arith.maximumf %5, %6 : vector<288x432xf32>
    %c0_6 = arith.constant 0 : index
    %c0_7 = arith.constant 0 : index
    %8 = vector.load %arg4[%c0_6, %c0_7] : memref<288x432xbf16, #tpu.memory_space<vmem>>, vector<288x432xbf16>
    %9 = arith.extf %8 : vector<288x432xbf16> to vector<288x432xf32>
    %10 = arith.mulf %7, %9 : vector<288x432xf32>
    %c0_8 = arith.constant 0 : index
    %c0_9 = arith.constant 0 : index
    %11 = vector.load %arg5[%c0_8, %c0_9] : memref<8x288xf32, #tpu.memory_space<vmem>>, vector<8x288xf32>
    %cst_10 = arith.constant dense<0.000000e+00> : vector<8x432xf32>
    %12 = tpu.matmul %11, %10, %cst_10 {dimension_numbers = #tpu.dot_dimension_numbers<[1], [0], [0], [1], [0, 0, 1, 1], [], []>} : vector<8x288xf32>, vector<288x432xf32>, vector<8x432xf32> -> vector<8x432xf32>
    %13 = arith.truncf %12 : vector<8x432xf32> to vector<8x432xbf16>
    %c0_11 = arith.constant 0 : index
    %c0_12 = arith.constant 0 : index
    %14 = vector.load %arg6[%c0_11, %c0_12] : memref<432x150xbf16, #tpu.memory_space<vmem>>, vector<432x150xbf16>
    %cst_13 = arith.constant dense<0.000000e+00> : vector<8x150xf32>
    %15 = tpu.matmul %13, %14, %cst_13 {dimension_numbers = #tpu.dot_dimension_numbers<[1], [0], [0], [1], [0, 0, 1, 1], [], []>} : vector<8x432xbf16>, vector<432x150xbf16>, vector<8x150xf32> -> vector<8x150xf32>
    %c0_14 = arith.constant 0 : index
    %c0_15 = arith.constant 0 : index
    %16 = vector.load %arg7[%c0_14, %c0_15] : memref<1x150xf32, #tpu.memory_space<vmem>>, vector<1x150xf32>
    %17 = vector.broadcast %16 : vector<1x150xf32> to vector<8x150xf32>
    %18 = arith.addf %15, %17 : vector<8x150xf32>
    %cst_16 = arith.constant 0.000000e+00 : f32
    %19 = vector.broadcast %cst_16 : f32 to vector<8x150xf32>
    %20 = arith.maximumf %18, %19 : vector<8x150xf32>
    %21 = arith.truncf %20 : vector<8x150xf32> to vector<8x150xbf16>
    %c0_17 = arith.constant 0 : index
    %c0_18 = arith.constant 0 : index
    %22 = vector.load %arg8[%c0_17, %c0_18] : memref<150x50xbf16, #tpu.memory_space<vmem>>, vector<150x50xbf16>
    %cst_19 = arith.constant dense<0.000000e+00> : vector<8x50xf32>
    %23 = tpu.matmul %21, %22, %cst_19 {dimension_numbers = #tpu.dot_dimension_numbers<[1], [0], [0], [1], [0, 0, 1, 1], [], []>} : vector<8x150xbf16>, vector<150x50xbf16>, vector<8x50xf32> -> vector<8x50xf32>
    %c0_20 = arith.constant 0 : index
    %c0_21 = arith.constant 0 : index
    %24 = vector.load %arg9[%c0_20, %c0_21] : memref<1x50xf32, #tpu.memory_space<vmem>>, vector<1x50xf32>
    %25 = vector.broadcast %24 : vector<1x50xf32> to vector<8x50xf32>
    %26 = arith.addf %23, %25 : vector<8x50xf32>
    %cst_22 = arith.constant 0.000000e+00 : f32
    %27 = vector.broadcast %cst_22 : f32 to vector<8x50xf32>
    %28 = arith.maximumf %26, %27 : vector<8x50xf32>
    %29 = arith.truncf %28 : vector<8x50xf32> to vector<8x50xbf16>
    %c0_23 = arith.constant 0 : index
    %c0_24 = arith.constant 0 : index
    %30 = vector.load %arg10[%c0_23, %c0_24] : memref<50x128xbf16, #tpu.memory_space<vmem>>, vector<50x128xbf16>
    %cst_25 = arith.constant dense<0.000000e+00> : vector<8x128xf32>
    %31 = tpu.matmul %29, %30, %cst_25 {dimension_numbers = #tpu.dot_dimension_numbers<[1], [0], [0], [1], [0, 0, 1, 1], [], []>} : vector<8x50xbf16>, vector<50x128xbf16>, vector<8x128xf32> -> vector<8x128xf32>
    %c0_26 = arith.constant 0 : index
    %c0_27 = arith.constant 0 : index
    %32 = vector.load %arg11[%c0_26, %c0_27] : memref<1x128xf32, #tpu.memory_space<vmem>>, vector<1x128xf32>
    %33 = vector.broadcast %32 : vector<1x128xf32> to vector<8x128xf32>
    %34 = arith.addf %31, %33 : vector<8x128xf32>
    %c0_28 = arith.constant 0 : index
    %c0_29 = arith.constant 0 : index
    %35 = vector.load %arg12[%c0_28, %c0_29] : memref<8x128xf32, #tpu.memory_space<vmem>>, vector<8x128xf32>
    tpu.vector_store %arg12[%c0_28, %c0_29], %34 {strides = array<i32>} : memref<8x128xf32, #tpu.memory_space<vmem>>, vector<8x128xf32>,
    return
  }
  func.func @transform_0(%arg0: i32) -> (i32, i32) {
    %c0_i32 = arith.constant 0 : i32
    %c0_i32_0 = arith.constant 0 : i32
    return %arg0, %c0_i32 : i32, i32
  }
  func.func @transform_1(%arg0: i32) -> (i32, i32) {
    %c0_i32 = arith.constant 0 : i32
    %c0_i32_0 = arith.constant 0 : i32
    %c0_i32_1 = arith.constant 0 : i32
    return %c0_i32, %c0_i32_0 : i32, i32
  }
  func.func @transform_2(%arg0: i32) -> (i32, i32) {
    %c0_i32 = arith.constant 0 : i32
    %c0_i32_0 = arith.constant 0 : i32
    %c0_i32_1 = arith.constant 0 : i32
    return %c0_i32, %c0_i32_0 : i32, i32
  }
  func.func @transform_3(%arg0: i32) -> (i32, i32) {
    %c0_i32 = arith.constant 0 : i32
    %c0_i32_0 = arith.constant 0 : i32
    %c0_i32_1 = arith.constant 0 : i32
    return %c0_i32, %c0_i32_0 : i32, i32
  }
  func.func @transform_4(%arg0: i32) -> (i32, i32) {
    %c0_i32 = arith.constant 0 : i32
    %c0_i32_0 = arith.constant 0 : i32
    %c0_i32_1 = arith.constant 0 : i32
    return %c0_i32, %c0_i32_0 : i32, i32
  }
  func.func @transform_5(%arg0: i32) -> (i32, i32) {
    %c0_i32 = arith.constant 0 : i32
    %c0_i32_0 = arith.constant 0 : i32
    %c0_i32_1 = arith.constant 0 : i32
    return %c0_i32, %c0_i32_0 : i32, i32
  }
  func.func @transform_6(%arg0: i32) -> (i32, i32) {
    %c0_i32 = arith.constant 0 : i32
    %c0_i32_0 = arith.constant 0 : i32
    %c0_i32_1 = arith.constant 0 : i32
    return %c0_i32, %c0_i32_0 : i32, i32
  }
  func.func @transform_7(%arg0: i32) -> (i32, i32) {
    %c0_i32 = arith.constant 0 : i32
    %c0_i32_0 = arith.constant 0 : i32
    %c0_i32_1 = arith.constant 0 : i32
    return %c0_i32, %c0_i32_0 : i32, i32
  }
  func.func @transform_8(%arg0: i32) -> (i32, i32) {
    %c0_i32 = arith.constant 0 : i32
    %c0_i32_0 = arith.constant 0 : i32
    %c0_i32_1 = arith.constant 0 : i32
    return %c0_i32, %c0_i32_0 : i32, i32
  }
  func.func @transform_9(%arg0: i32) -> (i32, i32) {
    %c0_i32 = arith.constant 0 : i32
    %c0_i32_0 = arith.constant 0 : i32
    %c0_i32_1 = arith.constant 0 : i32
    return %c0_i32, %c0_i32_0 : i32, i32
  }
  func.func @transform_10(%arg0: i32) -> (i32, i32) {
    %c0_i32 = arith.constant 0 : i32
    %c0_i32_0 = arith.constant 0 : i32
    %c0_i32_1 = arith.constant 0 : i32
    return %c0_i32, %c0_i32_0 : i32, i32
  }
  func.func @transform_11(%arg0: i32) -> (i32, i32) {
    %c0_i32 = arith.constant 0 : i32
    %c0_i32_0 = arith.constant 0 : i32
    return %arg0, %c0_i32 : i32, i32
  }
}

</mosaic_0001>

<llo_original>
// kernel: incept_conv_forward.1
$region0: #{incept_conv_forward.1}
  #allocation0 [shape = 'u32[]', space=smem, size = 0x4, offset = 0x4, fixed_abs, tag = 'smem constant byte address 0x4 - core index']
  #allocation1 [shape = 'u32[72,128]{1,0:T(1,128)}', space=vmem, size = 0x9000, scoped, tag = 'internal scratch']
  %s0 = inlined_call_operand.vmem [shape: bf16[288,84], index: 0, kind: input, shape index: {}]
  %s1 = inlined_call_operand.vmem [shape: bf16[84,432], index: 1, kind: input, shape index: {}]
  %s2 = inlined_call_operand.vmem [shape: f32[1,432], index: 2, kind: input, shape index: {}]
  %s3 = inlined_call_operand.vmem [shape: bf16[288,432], index: 3, kind: input, shape index: {}]
  %s4 = inlined_call_operand.vmem [shape: f32[8,288], index: 4, kind: input, shape index: {}]
  %s5 = inlined_call_operand.vmem [shape: bf16[432,150], index: 5, kind: input, shape index: {}]
  %s6 = inlined_call_operand.vmem [shape: f32[1,150], index: 6, kind: input, shape index: {}]
  %s7 = inlined_call_operand.vmem [shape: bf16[150,50], index: 7, kind: input, shape index: {}]
  %s8 = inlined_call_operand.vmem [shape: f32[1,50], index: 8, kind: input, shape index: {}]
  %s9 = inlined_call_operand.vmem [shape: bf16[50,128], index: 9, kind: input, shape index: {}]
  %s10 = inlined_call_operand.vmem [shape: f32[1,128], index: 10, kind: input, shape index: {}]
  %s11 = inlined_call_operand.vmem [shape: f32[8,128], index: 11, kind: output, shape index: {}]
  %s12 = sld [smem:[#allocation0]]
  $region54: #{incept_conv_forward.1} parent=0
    _
  %s14 = ssub.s32 1, %s12
  %s15 = scalar_select 0, %s14, %s12
  // Predicated region
  $region2: #{incept_conv_forward.1} parent=0 // pred_check
    _
  $region3: #{incept_conv_forward.1} parent=0 // pred_check_branch
    %17 = sbr.rel (0) target = $region5
  $region4: #{incept_conv_forward.1} parent=0 // pred_region
    _
  $region5: #{incept_conv_forward.1} parent=0 // pred_fallthru
    _
  // Predicated region
  $region6: #{incept_conv_forward.1} parent=0 // pred_check
    _
  $region7: #{incept_conv_forward.1} parent=0 // pred_check_branch
    %19 = sbr.rel (0) target = $region9
  $region8: #{incept_conv_forward.1} parent=0 // pred_region
    _
  $region9: #{incept_conv_forward.1} parent=0 // pred_fallthru
    _
  // Predicated region
  $region10: #{incept_conv_forward.1} parent=0 // pred_check
    _
  $region11: #{incept_conv_forward.1} parent=0 // pred_check_branch
    %21 = sbr.rel (0) target = $region13
  $region12: #{incept_conv_forward.1} parent=0 // pred_region
    _
  $region13: #{incept_conv_forward.1} parent=0 // pred_fallthru
    _
  // Predicated region
  $region14: #{incept_conv_forward.1} parent=0 // pred_check
    _
  $region15: #{incept_conv_forward.1} parent=0 // pred_check_branch
    %23 = sbr.rel (0) target = $region17
  $region16: #{incept_conv_forward.1} parent=0 // pred_region
    _
  $region17: #{incept_conv_forward.1} parent=0 // pred_fallthru
    _
  // Predicated region
  $region18: #{incept_conv_forward.1} parent=0 // pred_check
    _
  $region19: #{incept_conv_forward.1} parent=0 // pred_check_branch
    %25 = sbr.rel (0) target = $region21
  $region20: #{incept_conv_forward.1} parent=0 // pred_region
    _
  $region21: #{incept_conv_forward.1} parent=0 // pred_fallthru
    _
  // Predicated region
  $region22: #{incept_conv_forward.1} parent=0 // pred_check
    _
  $region23: #{incept_conv_forward.1} parent=0 // pred_check_branch
    %27 = sbr.rel (0) target = $region25
  $region24: #{incept_conv_forward.1} parent=0 // pred_region
    _
  $region25: #{incept_conv_forward.1} parent=0 // pred_fallthru
    _
  // Predicated region
  $region26: #{incept_conv_forward.1} parent=0 // pred_check
    _
  $region27: #{incept_conv_forward.1} parent=0 // pred_check_branch
    %29 = sbr.rel (0) target = $region29
  $region28: #{incept_conv_forward.1} parent=0 // pred_region
    _
  $region29: #{incept_conv_forward.1} parent=0 // pred_fallthru
    _
  // Predicated region
  $region30: #{incept_conv_forward.1} parent=0 // pred_check
    _
  $region31: #{incept_conv_forward.1} parent=0 // pred_check_branch
    %31 = sbr.rel (0) target = $region33
  $region32: #{incept_conv_forward.1} parent=0 // pred_region
    _
  $region33: #{incept_conv_forward.1} parent=0 // pred_fallthru
    _
  // Predicated region
  $region34: #{incept_conv_forward.1} parent=0 // pred_check
    _
  $region35: #{incept_conv_forward.1} parent=0 // pred_check_branch
    %33 = sbr.rel (0) target = $region37
  $region36: #{incept_conv_forward.1} parent=0 // pred_region
    _
  $region37: #{incept_conv_forward.1} parent=0 // pred_fallthru
    _
  // Predicated region
  $region38: #{incept_conv_forward.1} parent=0 // pred_check
    _
  $region39: #{incept_conv_forward.1} parent=0 // pred_check_branch
    %35 = sbr.rel (0) target = $region41
  $region40: #{incept_conv_forward.1} parent=0 // pred_region
    _
  $region41: #{incept_conv_forward.1} parent=0 // pred_fallthru
    _
  // Predicated region
  $region42: #{incept_conv_forward.1} parent=0 // pred_check
    _
  $region43: #{incept_conv_forward.1} parent=0 // pred_check_branch
    %37 = sbr.rel (0) target = $region45
  $region44: #{incept_conv_forward.1} parent=0 // pred_region
    _
  $region45: #{incept_conv_forward.1} parent=0 // pred_fallthru
    _
  %v39 = vld [vmem:[%s0] sm:$0xf]
  %v40 = vld [vmem:[%s0 + $0x4] sm:$0xf]
  %v41 = vld [vmem:[%s0 + $0x8] sm:$0xf]
  %v42 = vld [vmem:[%s0 + $0xc] sm:$0xf]
  %v43 = vld [vmem:[%s0 + $0x10] sm:$0xf]
  %v44 = vld [vmem:[%s0 + $0x14] sm:$0xf]
  %v45 = vld [vmem:[%s0 + $0x18] sm:$0xf]
  %v46 = vld [vmem:[%s0 + $0x1c] sm:$0xf]
  %v47 = vld [vmem:[%s0 + $0x20] sm:$0xf]
  %v48 = vld [vmem:[%s0 + $0x24] sm:$0xf]
  %v49 = vld [vmem:[%s0 + $0x28] sm:$0xf]
  %v50 = vld [vmem:[%s0 + $0x2c] sm:$0xf]
  %v51 = vld [vmem:[%s0 + $0x30] sm:$0xf]
  %v52 = vld [vmem:[%s0 + $0x34] sm:$0xf]
  %v53 = vld [vmem:[%s0 + $0x38] sm:$0xf]
  %v54 = vld [vmem:[%s0 + $0x3c] sm:$0xf]
  %v55 = vld [vmem:[%s0 + $0x40] sm:$0xf]
  %v56 = vld [vmem:[%s0 + $0x44] sm:$0xf]
  %v57 = vld [vmem:[%s0 + $0x48] sm:$0xf]
  %v58 = vld [vmem:[%s0 + $0x4c] sm:$0xf]
  %v59 = vld [vmem:[%s0 + $0x50] sm:$0xf]
  %v60 = vld [vmem:[%s0 + $0x54] sm:$0xf]
  %v61 = vld [vmem:[%s0 + $0x58] sm:$0xf]
  %v62 = vld [vmem:[%s0 + $0x5c] sm:$0xf]
  %v63 = vld [vmem:[%s0 + $0x60] sm:$0xf]
  %v64 = vld [vmem:[%s0 + $0x64] sm:$0xf]
  %v65 = vld [vmem:[%s0 + $0x68] sm:$0xf]
  %v66 = vld [vmem:[%s0 + $0x6c] sm:$0xf]
  %v67 = vld [vmem:[%s0 + $0x70] sm:$0xf]
  %v68 = vld [vmem:[%s0 + $0x74] sm:$0xf]
  %v69 = vld [vmem:[%s0 + $0x78] sm:$0xf]
  %v70 = vld [vmem:[%s0 + $0x7c] sm:$0xf]
  %v71 = vld [vmem:[%s0 + $0x80] sm:$0xf]
  %v72 = vld [vmem:[%s0 + $0x84] sm:$0xf]
  %v73 = vld [vmem:[%s0 + $0x88] sm:$0xf]
  %v74 = vld [vmem:[%s0 + $0x8c] sm:$0xf]
  %v75 = vld [vmem:[%s1] sm:$0xff]
  %v76 = vld [vmem:[%s1 + $0x8] sm:$0xff]
  %v77 = vld [vmem:[%s1 + $0x10] sm:$0xff]
  %v78 = vld [vmem:[%s1 + $0x18] sm:$0xff]
  %v79 = vld [vmem:[%s1 + $0x20] sm:$0xff]
  %v80 = vld [vmem:[%s1 + $0x28] sm:$0xff]
  %v81 = vld [vmem:[%s1 + $0x30] sm:$0xff]
  %v82 = vld [vmem:[%s1 + $0x38] sm:$0xff]
  %v83 = vld [vmem:[%s1 + $0x40] sm:$0xff]
  %v84 = vld [vmem:[%s1 + $0x48] sm:$0xff]
  %v85 = vld [vmem:[%s1 + $0x50] sm:$0xff]
  %v86 = vld [vmem:[%s1 + $0x58] sm:$0xff]
  %v87 = vld [vmem:[%s1 + $0x60] sm:$0xff]
  %v88 = vld [vmem:[%s1 + $0x68] sm:$0xff]
  %v89 = vld [vmem:[%s1 + $0x70] sm:$0xff]
  %v90 = vld [vmem:[%s1 + $0x78] sm:$0xff]
  %v91 = vld [vmem:[%s1 + $0x80] sm:$0xff]
  %v92 = vld [vmem:[%s1 + $0x88] sm:$0xff]
  %v93 = vld [vmem:[%s1 + $0x90] sm:$0xff]
  %v94 = vld [vmem:[%s1 + $0x98] sm:$0xff]
  %v95 = vld [vmem:[%s1 + $0xa0] sm:$0x33]
  %v96 = vld [vmem:[%s1 + $0xa8] sm:$0x33]
  %v97 = vld [vmem:[%s2] sm:$0xf]
  %v99 = vperm.slane %v97, 0
  %v100 = vperm.slane %v97, 1
  %v101 = vperm.slane %v97, 2
  %v102 = vperm.slane %v97, 3
  %v143 = vunpack.c.l.b16 %v39
  %v144 = vunpack.c.l.b16 %v40
  %v145 = vunpack.c.l.b16 %v41
  %v146 = vunpack.c.l.b16 %v42
  %v147 = vunpack.c.l.b16 %v43
  %v148 = vunpack.c.l.b16 %v44
  %v149 = vunpack.c.l.b16 %v45
  %v150 = vunpack.c.l.b16 %v46
  %v151 = vunpack.c.l.b16 %v47
  %v152 = vunpack.c.l.b16 %v48
  %v153 = vunpack.c.l.b16 %v49
  %v154 = vunpack.c.l.b16 %v50
  %v155 = vunpack.c.l.b16 %v51
  %v156 = vunpack.c.l.b16 %v52
  %v157 = vunpack.c.l.b16 %v53
  %v158 = vunpack.c.l.b16 %v54
  %v159 = vunpack.c.l.b16 %v55
  %v160 = vunpack.c.l.b16 %v56
  %v161 = vunpack.c.l.b16 %v57
  %v162 = vunpack.c.l.b16 %v58
  %v163 = vunpack.c.l.b16 %v59
  %v164 = vunpack.c.l.b16 %v60
  %v165 = vunpack.c.l.b16 %v61
  %v166 = vunpack.c.l.b16 %v62
  %v167 = vunpack.c.l.b16 %v63
  %v168 = vunpack.c.l.b16 %v64
  %v169 = vunpack.c.l.b16 %v65
  %v170 = vunpack.c.l.b16 %v66
  %v171 = vunpack.c.l.b16 %v67
  %v172 = vunpack.c.l.b16 %v68
  %v173 = vunpack.c.l.b16 %v69
  %v174 = vunpack.c.l.b16 %v70
  %v175 = vunpack.c.l.b16 %v71
  %v176 = vunpack.c.l.b16 %v72
  %v177 = vunpack.c.l.b16 %v73
  %v178 = vunpack.c.l.b16 %v74
  %v179 = vpack.c.b16 %v144, %v143
  %v180 = vpack.c.b16 %v146, %v145
  %v181 = vpack.c.b16 %v148, %v147
  %v182 = vpack.c.b16 %v150, %v149
  %v183 = vpack.c.b16 %v152, %v151
  %v184 = vpack.c.b16 %v154, %v153
  %v185 = vpack.c.b16 %v156, %v155
  %v186 = vpack.c.b16 %v158, %v157
  %v187 = vpack.c.b16 %v160, %v159
  %v188 = vpack.c.b16 %v162, %v161
  %v189 = vpack.c.b16 %v164, %v163
  %v190 = vpack.c.b16 %v166, %v165
  %v191 = vpack.c.b16 %v168, %v167
  %v192 = vpack.c.b16 %v170, %v169
  %v193 = vpack.c.b16 %v172, %v171
  %v194 = vpack.c.b16 %v174, %v173
  %v195 = vpack.c.b16 %v176, %v175
  %v196 = vpack.c.b16 %v178, %v177
  %v219 = vunpack.c.l.b16 %v75
  %v220 = vunpack.c.h.b16 %v75
  %v221 = vunpack.c.l.b16 %v76
  %v222 = vunpack.c.h.b16 %v76
  %v223 = vunpack.c.l.b16 %v77
  %v224 = vunpack.c.h.b16 %v77
  %v225 = vunpack.c.l.b16 %v78
  %v226 = vunpack.c.h.b16 %v78
  %v227 = vunpack.c.l.b16 %v79
  %v228 = vunpack.c.h.b16 %v79
  %v229 = vunpack.c.l.b16 %v80
  %v230 = vunpack.c.h.b16 %v80
  %v231 = vunpack.c.l.b16 %v81
  %v232 = vunpack.c.h.b16 %v81
  %v233 = vunpack.c.l.b16 %v82
  %v234 = vunpack.c.h.b16 %v82
  %v235 = vunpack.c.l.b16 %v83
  %v236 = vunpack.c.h.b16 %v83
  %v237 = vunpack.c.l.b16 %v84
  %v238 = vunpack.c.h.b16 %v84
  %v239 = vunpack.c.l.b16 %v85
  %v240 = vunpack.c.h.b16 %v85
  %v241 = vunpack.c.l.b16 %v86
  %v242 = vunpack.c.h.b16 %v86
  %v243 = vunpack.c.l.b16 %v87
  %v244 = vunpack.c.h.b16 %v87
  %v245 = vunpack.c.l.b16 %v88
  %v246 = vunpack.c.h.b16 %v88
  %v247 = vunpack.c.l.b16 %v89
  %v248 = vunpack.c.h.b16 %v89
  %v249 = vunpack.c.l.b16 %v90
  %v250 = vunpack.c.h.b16 %v90
  %v251 = vunpack.c.l.b16 %v91
  %v252 = vunpack.c.h.b16 %v91
  %v253 = vunpack.c.l.b16 %v92
  %v254 = vunpack.c.h.b16 %v92
  %v255 = vunpack.c.l.b16 %v93
  %v256 = vunpack.c.h.b16 %v93
  %v257 = vunpack.c.l.b16 %v94
  %v258 = vunpack.c.h.b16 %v94
  %v259 = vunpack.c.l.b16 %v95
  %v260 = vunpack.c.h.b16 %v95
  %v261 = vunpack.c.l.b16 %v96
  %v262 = vunpack.c.h.b16 %v96
  %v263 = vpack.c.b16 %v223, %v219
  %v264 = vpack.c.b16 %v224, %v220
  %v265 = vpack.c.b16 %v225, %v221
  %v266 = vpack.c.b16 %v226, %v222
  %v267 = vpack.c.b16 %v231, %v227
  %v268 = vpack.c.b16 %v232, %v228
  %v269 = vpack.c.b16 %v233, %v229
  %v270 = vpack.c.b16 %v234, %v230
  %v271 = vpack.c.b16 %v239, %v235
  %v272 = vpack.c.b16 %v240, %v236
  %v273 = vpack.c.b16 %v241, %v237
  %v274 = vpack.c.b16 %v242, %v238
  %v275 = vpack.c.b16 %v247, %v243
  %v276 = vpack.c.b16 %v248, %v244
  %v277 = vpack.c.b16 %v249, %v245
  %v278 = vpack.c.b16 %v250, %v246
  %v279 = vpack.c.b16 %v255, %v251
  %v280 = vpack.c.b16 %v256, %v252
  %v281 = vpack.c.b16 %v257, %v253
  %v282 = vpack.c.b16 %v258, %v254
  %v283 = vpack.c.b16 %v259, %v259
  %v284 = vpack.c.b16 %v260, %v260
  %v285 = vpack.c.b16 %v261, %v261
  %v286 = vpack.c.b16 %v262, %v262
  %vm307 = vcmask 687104
  %v309 = vsel %vm307, %v179, 0
  %v312 = vsel %vm307, %v180, 0
  %v315 = vsel %vm307, %v181, 0
  %v318 = vsel %vm307, %v182, 0
  %v321 = vsel %vm307, %v183, 0
  %v324 = vsel %vm307, %v184, 0
  %v327 = vsel %vm307, %v185, 0
  %v330 = vsel %vm307, %v186, 0
  %v333 = vsel %vm307, %v187, 0
  %v336 = vsel %vm307, %v188, 0
  %v339 = vsel %vm307, %v189, 0
  %v342 = vsel %vm307, %v190, 0
  %v345 = vsel %vm307, %v191, 0
  %v348 = vsel %vm307, %v192, 0
  %v351 = vsel %vm307, %v193, 0
  %v354 = vsel %vm307, %v194, 0
  %v357 = vsel %vm307, %v195, 0
  %v360 = vsel %vm307, %v196, 0
  %vm362 = vcmask 1041408
  %v364 = vsel %vm362, %v283, 0
  %v367 = vsel %vm362, %v284, 0
  %v370 = vsel %vm362, %v285, 0
  %v373 = vsel %vm362, %v286, 0
  %375 = vmatpush.bf16.msra.mxu0 0
  %376 = vmatpush.bf16.msra.mxu0 0
  %377 = vmatpush.bf16.msra.mxu0 %v364
  %378 = vmatpush.bf16.msra.mxu0 %v279
  %379 = vmatpush.bf16.msra.mxu0 %v275
  %380 = vmatpush.bf16.msra.mxu0 %v271
  %381 = vmatpush.bf16.msra.mxu0 %v267
  %382 = vmatpush.bf16.msra.mxu0 %v263
  %383 = vmatmul.bf16.gmra.mxu0 %v309
  %v384 = vpop.f32.mrf.mxu0
  %v385 = vadd.f32 %v99, %v384
  %v386 = vpop.f32.mrf.mxu0
  %v387 = vadd.f32 %v99, %v386
  %388 = vmatmul.bf16.gmra.mxu0 %v312
  %v389 = vpop.f32.mrf.mxu0
  %v390 = vadd.f32 %v99, %v389
  %v391 = vpop.f32.mrf.mxu0
  %v392 = vadd.f32 %v99, %v391
  %393 = vmatmul.bf16.gmra.mxu0 %v315
  %v394 = vpop.f32.mrf.mxu0
  %v395 = vadd.f32 %v99, %v394
  %v396 = vpop.f32.mrf.mxu0
  %v397 = vadd.f32 %v99, %v396
  %398 = vmatmul.bf16.gmra.mxu0 %v318
  %v399 = vpop.f32.mrf.mxu0
  %v400 = vadd.f32 %v99, %v399
  %v401 = vpop.f32.mrf.mxu0
  %v402 = vadd.f32 %v99, %v401
  %403 = vmatmul.bf16.gmra.mxu0 %v321
  %v404 = vpop.f32.mrf.mxu0
  %v405 = vadd.f32 %v99, %v404
  %v406 = vpop.f32.mrf.mxu0
  %v407 = vadd.f32 %v99, %v406
  %408 = vmatmul.bf16.gmra.mxu0 %v324
  %v409 = vpop.f32.mrf.mxu0
  %v410 = vadd.f32 %v99, %v409
  %v411 = vpop.f32.mrf.mxu0
  %v412 = vadd.f32 %v99, %v411
  %413 = vmatmul.bf16.gmra.mxu0 %v327
  %v414 = vpop.f32.mrf.mxu0
  %v415 = vadd.f32 %v99, %v414
  %v416 = vpop.f32.mrf.mxu0
  %v417 = vadd.f32 %v99, %v416
  %418 = vmatmul.bf16.gmra.mxu0 %v330
  %v419 = vpop.f32.mrf.mxu0
  %v420 = vadd.f32 %v99, %v419
  %v421 = vpop.f32.mrf.mxu0
  %v422 = vadd.f32 %v99, %v421
  %423 = vmatmul.bf16.gmra.mxu0 %v333
  %v424 = vpop.f32.mrf.mxu0
  %v425 = vadd.f32 %v99, %v424
  %v426 = vpop.f32.mrf.mxu0
  %v427 = vadd.f32 %v99, %v426
  %428 = vmatmul.bf16.gmra.mxu0 %v336
  %v429 = vpop.f32.mrf.mxu0
  %v430 = vadd.f32 %v99, %v429
  %v431 = vpop.f32.mrf.mxu0
  %v432 = vadd.f32 %v99, %v431
  %433 = vmatmul.bf16.gmra.mxu0 %v339
  %v434 = vpop.f32.mrf.mxu0
  %v435 = vadd.f32 %v99, %v434
  %v436 = vpop.f32.mrf.mxu0
  %v437 = vadd.f32 %v99, %v436
  %438 = vmatmul.bf16.gmra.mxu0 %v342
  %v439 = vpop.f32.mrf.mxu0
  %v440 = vadd.f32 %v99, %v439
  %v441 = vpop.f32.mrf.mxu0
  %v442 = vadd.f32 %v99, %v441
  %443 = vmatmul.bf16.gmra.mxu0 %v345
  %v444 = vpop.f32.mrf.mxu0
  %v445 = vadd.f32 %v99, %v444
  %v446 = vpop.f32.mrf.mxu0
  %v447 = vadd.f32 %v99, %v446
  %448 = vmatmul.bf16.gmra.mxu0 %v348
  %v449 = vpop.f32.mrf.mxu0
  %v450 = vadd.f32 %v99, %v449
  %v451 = vpop.f32.mrf.mxu0
  %v452 = vadd.f32 %v99, %v451
  %453 = vmatmul.bf16.gmra.mxu0 %v351
  %v454 = vpop.f32.mrf.mxu0
  %v455 = vadd.f32 %v99, %v454
  %v456 = vpop.f32.mrf.mxu0
  %v457 = vadd.f32 %v99, %v456
  %458 = vmatmul.bf16.gmra.mxu0 %v354
  %v459 = vpop.f32.mrf.mxu0
  %v460 = vadd.f32 %v99, %v459
  %v461 = vpop.f32.mrf.mxu0
  %v462 = vadd.f32 %v99, %v461
  %463 = vmatmul.bf16.gmra.mxu0 %v357
  %v464 = vpop.f32.mrf.mxu0
  %v465 = vadd.f32 %v99, %v464
  %v466 = vpop.f32.mrf.mxu0
  %v467 = vadd.f32 %v99, %v466
  %468 = vmatmul.bf16.gmra.mxu0 %v360
  %v469 = vpop.f32.mrf.mxu0
  %v470 = vadd.f32 %v99, %v469
  %v471 = vpop.f32.mrf.mxu0
  %v472 = vadd.f32 %v99, %v471
  %473 = vdwg.mxu0
  %474 = vmatpush.bf16.msra.mxu0 0
  %475 = vmatpush.bf16.msra.mxu0 0
  %476 = vmatpush.bf16.msra.mxu0 %v367
  %477 = vmatpush.bf16.msra.mxu0 %v280
  %478 = vmatpush.bf16.msra.mxu0 %v276
  %479 = vmatpush.bf16.msra.mxu0 %v272
  %480 = vmatpush.bf16.msra.mxu0 %v268
  %481 = vmatpush.bf16.msra.mxu0 %v264
  %482 = vmatmul.bf16.gmra.mxu0 %v309
  %v483 = vpop.f32.mrf.mxu0
  %v484 = vadd.f32 %v100, %v483
  %v485 = vpop.f32.mrf.mxu0
  %v486 = vadd.f32 %v100, %v485
  %487 = vmatmul.bf16.gmra.mxu0 %v312
  %v488 = vpop.f32.mrf.mxu0
  %v489 = vadd.f32 %v100, %v488
  %v490 = vpop.f32.mrf.mxu0
  %v491 = vadd.f32 %v100, %v490
  %492 = vmatmul.bf16.gmra.mxu0 %v315
  %v493 = vpop.f32.mrf.mxu0
  %v494 = vadd.f32 %v100, %v493
  %v495 = vpop.f32.mrf.mxu0
  %v496 = vadd.f32 %v100, %v495
  %497 = vmatmul.bf16.gmra.mxu0 %v318
  %v498 = vpop.f32.mrf.mxu0
  %v499 = vadd.f32 %v100, %v498
  %v500 = vpop.f32.mrf.mxu0
  %v501 = vadd.f32 %v100, %v500
  %502 = vmatmul.bf16.gmra.mxu0 %v321
  %v503 = vpop.f32.mrf.mxu0
  %v504 = vadd.f32 %v100, %v503
  %v505 = vpop.f32.mrf.mxu0
  %v506 = vadd.f32 %v100, %v505
  %507 = vmatmul.bf16.gmra.mxu0 %v324
  %v508 = vpop.f32.mrf.mxu0
  %v509 = vadd.f32 %v100, %v508
  %v510 = vpop.f32.mrf.mxu0
  %v511 = vadd.f32 %v100, %v510
  %512 = vmatmul.bf16.gmra.mxu0 %v327
  %v513 = vpop.f32.mrf.mxu0
  %v514 = vadd.f32 %v100, %v513
  %v515 = vpop.f32.mrf.mxu0
  %v516 = vadd.f32 %v100, %v515
  %517 = vmatmul.bf16.gmra.mxu0 %v330
  %v518 = vpop.f32.mrf.mxu0
  %v519 = vadd.f32 %v100, %v518
  %v520 = vpop.f32.mrf.mxu0
  %v521 = vadd.f32 %v100, %v520
  %522 = vmatmul.bf16.gmra.mxu0 %v333
  %v523 = vpop.f32.mrf.mxu0
  %v524 = vadd.f32 %v100, %v523
  %v525 = vpop.f32.mrf.mxu0
  %v526 = vadd.f32 %v100, %v525
  %527 = vmatmul.bf16.gmra.mxu0 %v336
  %v528 = vpop.f32.mrf.mxu0
  %v529 = vadd.f32 %v100, %v528
  %v530 = vpop.f32.mrf.mxu0
  %v531 = vadd.f32 %v100, %v530
  %532 = vmatmul.bf16.gmra.mxu0 %v339
  %v533 = vpop.f32.mrf.mxu0
  %v534 = vadd.f32 %v100, %v533
  %v535 = vpop.f32.mrf.mxu0
  %v536 = vadd.f32 %v100, %v535
  %537 = vmatmul.bf16.gmra.mxu0 %v342
  %v538 = vpop.f32.mrf.mxu0
  %v539 = vadd.f32 %v100, %v538
  %v540 = vpop.f32.mrf.mxu0
  %v541 = vadd.f32 %v100, %v540
  %542 = vmatmul.bf16.gmra.mxu0 %v345
  %v543 = vpop.f32.mrf.mxu0
  %v544 = vadd.f32 %v100, %v543
  %v545 = vpop.f32.mrf.mxu0
  %v546 = vadd.f32 %v100, %v545
  %547 = vmatmul.bf16.gmra.mxu0 %v348
  %v548 = vpop.f32.mrf.mxu0
  %v549 = vadd.f32 %v100, %v548
  %v550 = vpop.f32.mrf.mxu0
  %v551 = vadd.f32 %v100, %v550
  %552 = vmatmul.bf16.gmra.mxu0 %v351
  %v553 = vpop.f32.mrf.mxu0
  %v554 = vadd.f32 %v100, %v553
  %v555 = vpop.f32.mrf.mxu0
  %v556 = vadd.f32 %v100, %v555
  %557 = vmatmul.bf16.gmra.mxu0 %v354
  %v558 = vpop.f32.mrf.mxu0
  %v559 = vadd.f32 %v100, %v558
  %v560 = vpop.f32.mrf.mxu0
  %v561 = vadd.f32 %v100, %v560
  %562 = vmatmul.bf16.gmra.mxu0 %v357
  %v563 = vpop.f32.mrf.mxu0
  %v564 = vadd.f32 %v100, %v563
  %v565 = vpop.f32.mrf.mxu0
  %v566 = vadd.f32 %v100, %v565
  %567 = vmatmul.bf16.gmra.mxu0 %v360
  %v568 = vpop.f32.mrf.mxu0
  %v569 = vadd.f32 %v100, %v568
  %v570 = vpop.f32.mrf.mxu0
  %v571 = vadd.f32 %v100, %v570
  %572 = vdwg.mxu0
  %573 = vmatpush.bf16.msra.mxu0 0
  %574 = vmatpush.bf16.msra.mxu0 0
  %575 = vmatpush.bf16.msra.mxu0 %v370
  %576 = vmatpush.bf16.msra.mxu0 %v281
  %577 = vmatpush.bf16.msra.mxu0 %v277
  %578 = vmatpush.bf16.msra.mxu0 %v273
  %579 = vmatpush.bf16.msra.mxu0 %v269
  %580 = vmatpush.bf16.msra.mxu0 %v265
  %581 = vmatmul.bf16.gmra.mxu0 %v309
  %v582 = vpop.f32.mrf.mxu0
  %v583 = vadd.f32 %v101, %v582
  %v584 = vpop.f32.mrf.mxu0
  %v585 = vadd.f32 %v101, %v584
  %586 = vmatmul.bf16.gmra.mxu0 %v312
  %v587 = vpop.f32.mrf.mxu0
  %v588 = vadd.f32 %v101, %v587
  %v589 = vpop.f32.mrf.mxu0
  %v590 = vadd.f32 %v101, %v589
  %591 = vmatmul.bf16.gmra.mxu0 %v315
  %v592 = vpop.f32.mrf.mxu0
  %v593 = vadd.f32 %v101, %v592
  %v594 = vpop.f32.mrf.mxu0
  %v595 = vadd.f32 %v101, %v594
  %596 = vmatmul.bf16.gmra.mxu0 %v318
  %v597 = vpop.f32.mrf.mxu0
  %v598 = vadd.f32 %v101, %v597
  %v599 = vpop.f32.mrf.mxu0
  %v600 = vadd.f32 %v101, %v599
  %601 = vmatmul.bf16.gmra.mxu0 %v321
  %v602 = vpop.f32.mrf.mxu0
  %v603 = vadd.f32 %v101, %v602
  %v604 = vpop.f32.mrf.mxu0
  %v605 = vadd.f32 %v101, %v604
  %606 = vmatmul.bf16.gmra.mxu0 %v324
  %v607 = vpop.f32.mrf.mxu0
  %v608 = vadd.f32 %v101, %v607
  %v609 = vpop.f32.mrf.mxu0
  %v610 = vadd.f32 %v101, %v609
  %611 = vmatmul.bf16.gmra.mxu0 %v327
  %v612 = vpop.f32.mrf.mxu0
  %v613 = vadd.f32 %v101, %v612
  %v614 = vpop.f32.mrf.mxu0
  %v615 = vadd.f32 %v101, %v614
  %616 = vmatmul.bf16.gmra.mxu0 %v330
  %v617 = vpop.f32.mrf.mxu0
  %v618 = vadd.f32 %v101, %v617
  %v619 = vpop.f32.mrf.mxu0
  %v620 = vadd.f32 %v101, %v619
  %621 = vmatmul.bf16.gmra.mxu0 %v333
  %v622 = vpop.f32.mrf.mxu0
  %v623 = vadd.f32 %v101, %v622
  %v624 = vpop.f32.mrf.mxu0
  %v625 = vadd.f32 %v101, %v624
  %626 = vmatmul.bf16.gmra.mxu0 %v336
  %v627 = vpop.f32.mrf.mxu0
  %v628 = vadd.f32 %v101, %v627
  %v629 = vpop.f32.mrf.mxu0
  %v630 = vadd.f32 %v101, %v629
  %631 = vmatmul.bf16.gmra.mxu0 %v339
  %v632 = vpop.f32.mrf.mxu0
  %v633 = vadd.f32 %v101, %v632
  %v634 = vpop.f32.mrf.mxu0
  %v635 = vadd.f32 %v101, %v634
  %636 = vmatmul.bf16.gmra.mxu0 %v342
  %v637 = vpop.f32.mrf.mxu0
  %v638 = vadd.f32 %v101, %v637
  %v639 = vpop.f32.mrf.mxu0
  %v640 = vadd.f32 %v101, %v639
  %641 = vmatmul.bf16.gmra.mxu0 %v345
  %v642 = vpop.f32.mrf.mxu0
  %v643 = vadd.f32 %v101, %v642
  %v644 = vpop.f32.mrf.mxu0
  %v645 = vadd.f32 %v101, %v644
  %646 = vmatmul.bf16.gmra.mxu0 %v348
  %v647 = vpop.f32.mrf.mxu0
  %v648 = vadd.f32 %v101, %v647
  %v649 = vpop.f32.mrf.mxu0
  %v650 = vadd.f32 %v101, %v649
  %651 = vmatmul.bf16.gmra.mxu0 %v351
  %v652 = vpop.f32.mrf.mxu0
  %v653 = vadd.f32 %v101, %v652
  %v654 = vpop.f32.mrf.mxu0
  %v655 = vadd.f32 %v101, %v654
  %656 = vmatmul.bf16.gmra.mxu0 %v354
  %v657 = vpop.f32.mrf.mxu0
  %v658 = vadd.f32 %v101, %v657
  %v659 = vpop.f32.mrf.mxu0
  %v660 = vadd.f32 %v101, %v659
  %661 = vmatmul.bf16.gmra.mxu0 %v357
  %v662 = vpop.f32.mrf.mxu0
  %v663 = vadd.f32 %v101, %v662
  %v664 = vpop.f32.mrf.mxu0
  %v665 = vadd.f32 %v101, %v664
  %666 = vmatmul.bf16.gmra.mxu0 %v360
  %v667 = vpop.f32.mrf.mxu0
  %v668 = vadd.f32 %v101, %v667
  %v669 = vpop.f32.mrf.mxu0
  %v670 = vadd.f32 %v101, %v669
  %671 = vdwg.mxu0
  %672 = vmatpush.bf16.msra.mxu0 0
  %673 = vmatpush.bf16.msra.mxu0 0
  %674 = vmatpush.bf16.msra.mxu0 %v373
  %675 = vmatpush.bf16.msra.mxu0 %v282
  %676 = vmatpush.bf16.msra.mxu0 %v278
  %677 = vmatpush.bf16.msra.mxu0 %v274
  %678 = vmatpush.bf16.msra.mxu0 %v270
  %679 = vmatpush.bf16.msra.mxu0 %v266
  %680 = vmatmul.bf16.gmra.mxu0 %v309
  %v681 = vpop.f32.mrf.mxu0
  %v682 = vadd.f32 %v102, %v681
  %v683 = vpop.f32.mrf.mxu0
  %v684 = vadd.f32 %v102, %v683
  %685 = vmatmul.bf16.gmra.mxu0 %v312
  %v686 = vpop.f32.mrf.mxu0
  %v687 = vadd.f32 %v102, %v686
  %v688 = vpop.f32.mrf.mxu0
  %v689 = vadd.f32 %v102, %v688
  %690 = vmatmul.bf16.gmra.mxu0 %v315
  %v691 = vpop.f32.mrf.mxu0
  %v692 = vadd.f32 %v102, %v691
  %v693 = vpop.f32.mrf.mxu0
  %v694 = vadd.f32 %v102, %v693
  %695 = vmatmul.bf16.gmra.mxu0 %v318
  %v696 = vpop.f32.mrf.mxu0
  %v697 = vadd.f32 %v102, %v696
  %v698 = vpop.f32.mrf.mxu0
  %v699 = vadd.f32 %v102, %v698
  %700 = vmatmul.bf16.gmra.mxu0 %v321
  %v701 = vpop.f32.mrf.mxu0
  %v702 = vadd.f32 %v102, %v701
  %v703 = vpop.f32.mrf.mxu0
  %v704 = vadd.f32 %v102, %v703
  %705 = vmatmul.bf16.gmra.mxu0 %v324
  %v706 = vpop.f32.mrf.mxu0
  %v707 = vadd.f32 %v102, %v706
  %v708 = vpop.f32.mrf.mxu0
  %v709 = vadd.f32 %v102, %v708
  %710 = vmatmul.bf16.gmra.mxu0 %v327
  %v711 = vpop.f32.mrf.mxu0
  %v712 = vadd.f32 %v102, %v711
  %v713 = vpop.f32.mrf.mxu0
  %v714 = vadd.f32 %v102, %v713
  %715 = vmatmul.bf16.gmra.mxu0 %v330
  %v716 = vpop.f32.mrf.mxu0
  %v717 = vadd.f32 %v102, %v716
  %v718 = vpop.f32.mrf.mxu0
  %v719 = vadd.f32 %v102, %v718
  %720 = vmatmul.bf16.gmra.mxu0 %v333
  %v721 = vpop.f32.mrf.mxu0
  %v722 = vadd.f32 %v102, %v721
  %v723 = vpop.f32.mrf.mxu0
  %v724 = vadd.f32 %v102, %v723
  %725 = vmatmul.bf16.gmra.mxu0 %v336
  %v726 = vpop.f32.mrf.mxu0
  %v727 = vadd.f32 %v102, %v726
  %v728 = vpop.f32.mrf.mxu0
  %v729 = vadd.f32 %v102, %v728
  %730 = vmatmul.bf16.gmra.mxu0 %v339
  %v731 = vpop.f32.mrf.mxu0
  %v732 = vadd.f32 %v102, %v731
  %v733 = vpop.f32.mrf.mxu0
  %v734 = vadd.f32 %v102, %v733
  %735 = vmatmul.bf16.gmra.mxu0 %v342
  %v736 = vpop.f32.mrf.mxu0
  %v737 = vadd.f32 %v102, %v736
  %v738 = vpop.f32.mrf.mxu0
  %v739 = vadd.f32 %v102, %v738
  %740 = vmatmul.bf16.gmra.mxu0 %v345
  %v741 = vpop.f32.mrf.mxu0
  %v742 = vadd.f32 %v102, %v741
  %v743 = vpop.f32.mrf.mxu0
  %v744 = vadd.f32 %v102, %v743
  %745 = vmatmul.bf16.gmra.mxu0 %v348
  %v746 = vpop.f32.mrf.mxu0
  %v747 = vadd.f32 %v102, %v746
  %v748 = vpop.f32.mrf.mxu0
  %v749 = vadd.f32 %v102, %v748
  %750 = vmatmul.bf16.gmra.mxu0 %v351
  %v751 = vpop.f32.mrf.mxu0
  %v752 = vadd.f32 %v102, %v751
  %v753 = vpop.f32.mrf.mxu0
  %v754 = vadd.f32 %v102, %v753
  %755 = vmatmul.bf16.gmra.mxu0 %v354
  %v756 = vpop.f32.mrf.mxu0
  %v757 = vadd.f32 %v102, %v756
  %v758 = vpop.f32.mrf.mxu0
  %v759 = vadd.f32 %v102, %v758
  %760 = vmatmul.bf16.gmra.mxu0 %v357
  %v761 = vpop.f32.mrf.mxu0
  %v762 = vadd.f32 %v102, %v761
  %v763 = vpop.f32.mrf.mxu0
  %v764 = vadd.f32 %v102, %v763
  %765 = vmatmul.bf16.gmra.mxu0 %v360
  %v766 = vpop.f32.mrf.mxu0
  %v767 = vadd.f32 %v102, %v766
  %v768 = vpop.f32.mrf.mxu0
  %v769 = vadd.f32 %v102, %v768
  %770 = vdwg.mxu0
  %v771 = vmax.f32 %v385, 0.0
  %v772 = vmax.f32 %v484, 0.0
  %v773 = vmax.f32 %v583, 0.0
  %v774 = vmax.f32 %v682, 0.0
  %v775 = vmax.f32 %v387, 0.0
  %v776 = vmax.f32 %v486, 0.0
  %v777 = vmax.f32 %v585, 0.0
  %v778 = vmax.f32 %v684, 0.0
  %v779 = vmax.f32 %v390, 0.0
  %v780 = vmax.f32 %v489, 0.0
  %v781 = vmax.f32 %v588, 0.0
  %v782 = vmax.f32 %v687, 0.0
  %v783 = vmax.f32 %v392, 0.0
  %v784 = vmax.f32 %v491, 0.0
  %v785 = vmax.f32 %v590, 0.0
  %v786 = vmax.f32 %v689, 0.0
  %v787 = vmax.f32 %v395, 0.0
  %v788 = vmax.f32 %v494, 0.0
  %v789 = vmax.f32 %v593, 0.0
  %v790 = vmax.f32 %v692, 0.0
  %v791 = vmax.f32 %v397, 0.0
  %v792 = vmax.f32 %v496, 0.0
  %v793 = vmax.f32 %v595, 0.0
  %v794 = vmax.f32 %v694, 0.0
  %v795 = vmax.f32 %v400, 0.0
  %v796 = vmax.f32 %v499, 0.0
  %v797 = vmax.f32 %v598, 0.0
  %v798 = vmax.f32 %v697, 0.0
  %v799 = vmax.f32 %v402, 0.0
  %v800 = vmax.f32 %v501, 0.0
  %v801 = vmax.f32 %v600, 0.0
  %v802 = vmax.f32 %v699, 0.0
  %v803 = vmax.f32 %v405, 0.0
  %v804 = vmax.f32 %v504, 0.0
  %v805 = vmax.f32 %v603, 0.0
  %v806 = vmax.f32 %v702, 0.0
  %v807 = vmax.f32 %v407, 0.0
  %v808 = vmax.f32 %v506, 0.0
  %v809 = vmax.f32 %v605, 0.0
  %v810 = vmax.f32 %v704, 0.0
  %v811 = vmax.f32 %v410, 0.0
  %v812 = vmax.f32 %v509, 0.0
  %v813 = vmax.f32 %v608, 0.0
  %v814 = vmax.f32 %v707, 0.0
  %v815 = vmax.f32 %v412, 0.0
  %v816 = vmax.f32 %v511, 0.0
  %v817 = vmax.f32 %v610, 0.0
  %v818 = vmax.f32 %v709, 0.0
  %v819 = vmax.f32 %v415, 0.0
  %v820 = vmax.f32 %v514, 0.0
  %v821 = vmax.f32 %v613, 0.0
  %v822 = vmax.f32 %v712, 0.0
  %v823 = vmax.f32 %v417, 0.0
  %v824 = vmax.f32 %v516, 0.0
  %v825 = vmax.f32 %v615, 0.0
  %v826 = vmax.f32 %v714, 0.0
  %v827 = vmax.f32 %v420, 0.0
  %v828 = vmax.f32 %v519, 0.0
  %v829 = vmax.f32 %v618, 0.0
  %v830 = vmax.f32 %v717, 0.0
  %v831 = vmax.f32 %v422, 0.0
  %v832 = vmax.f32 %v521, 0.0
  %v833 = vmax.f32 %v620, 0.0
  %v834 = vmax.f32 %v719, 0.0
  %v835 = vmax.f32 %v425, 0.0
  %v836 = vmax.f32 %v524, 0.0
  %v837 = vmax.f32 %v623, 0.0
  %v838 = vmax.f32 %v722, 0.0
  %v839 = vmax.f32 %v427, 0.0
  %v840 = vmax.f32 %v526, 0.0
  %v841 = vmax.f32 %v625, 0.0
  %v842 = vmax.f32 %v724, 0.0
  %v843 = vmax.f32 %v430, 0.0
  %v844 = vmax.f32 %v529, 0.0
  %v845 = vmax.f32 %v628, 0.0
  %v846 = vmax.f32 %v727, 0.0
  %v847 = vmax.f32 %v432, 0.0
  %v848 = vmax.f32 %v531, 0.0
  %v849 = vmax.f32 %v630, 0.0
  %v850 = vmax.f32 %v729, 0.0
  %v851 = vmax.f32 %v435, 0.0
  %v852 = vmax.f32 %v534, 0.0
  %v853 = vmax.f32 %v633, 0.0
  %v854 = vmax.f32 %v732, 0.0
  %v855 = vmax.f32 %v437, 0.0
  %v856 = vmax.f32 %v536, 0.0
  %v857 = vmax.f32 %v635, 0.0
  %v858 = vmax.f32 %v734, 0.0
  %v859 = vmax.f32 %v440, 0.0
  %v860 = vmax.f32 %v539, 0.0
  %v861 = vmax.f32 %v638, 0.0
  %v862 = vmax.f32 %v737, 0.0
  %v863 = vmax.f32 %v442, 0.0
  %v864 = vmax.f32 %v541, 0.0
  %v865 = vmax.f32 %v640, 0.0
  %v866 = vmax.f32 %v739, 0.0
  %v867 = vmax.f32 %v445, 0.0
  %v868 = vmax.f32 %v544, 0.0
  %v869 = vmax.f32 %v643, 0.0
  %v870 = vmax.f32 %v742, 0.0
  %v871 = vmax.f32 %v447, 0.0
  %v872 = vmax.f32 %v546, 0.0
  %v873 = vmax.f32 %v645, 0.0
  %v874 = vmax.f32 %v744, 0.0
  %v875 = vmax.f32 %v450, 0.0
  %v876 = vmax.f32 %v549, 0.0
  %v877 = vmax.f32 %v648, 0.0
  %v878 = vmax.f32 %v747, 0.0
  %v879 = vmax.f32 %v452, 0.0
  %v880 = vmax.f32 %v551, 0.0
  %v881 = vmax.f32 %v650, 0.0
  %v882 = vmax.f32 %v749, 0.0
  %v883 = vmax.f32 %v455, 0.0
  %v884 = vmax.f32 %v554, 0.0
  %v885 = vmax.f32 %v653, 0.0
  %v886 = vmax.f32 %v752, 0.0
  %v887 = vmax.f32 %v457, 0.0
  %v888 = vmax.f32 %v556, 0.0
  %v889 = vmax.f32 %v655, 0.0
  %v890 = vmax.f32 %v754, 0.0
  %v891 = vmax.f32 %v460, 0.0
  %v892 = vmax.f32 %v559, 0.0
  %v893 = vmax.f32 %v658, 0.0
  %v894 = vmax.f32 %v757, 0.0
  %v895 = vmax.f32 %v462, 0.0
  %v896 = vmax.f32 %v561, 0.0
  %v897 = vmax.f32 %v660, 0.0
  %v898 = vmax.f32 %v759, 0.0
  %v899 = vmax.f32 %v465, 0.0
  %v900 = vmax.f32 %v564, 0.0
  %v901 = vmax.f32 %v663, 0.0
  %v902 = vmax.f32 %v762, 0.0
  %v903 = vmax.f32 %v467, 0.0
  %v904 = vmax.f32 %v566, 0.0
  %v905 = vmax.f32 %v665, 0.0
  %v906 = vmax.f32 %v764, 0.0
  %v907 = vmax.f32 %v470, 0.0
  %v908 = vmax.f32 %v569, 0.0
  %v909 = vmax.f32 %v668, 0.0
  %v910 = vmax.f32 %v767, 0.0
  %v911 = vmax.f32 %v472, 0.0
  %v912 = vmax.f32 %v571, 0.0
  %v913 = vmax.f32 %v670, 0.0
  %v914 = vmax.f32 %v769, 0.0
  %v915 = vld [vmem:[%s3] sm:$0xff]
  %v916 = vld [vmem:[%s3 + $0x8] sm:$0xff]
  %v917 = vld [vmem:[%s3 + $0x10] sm:$0xff]
  %v918 = vld [vmem:[%s3 + $0x18] sm:$0xff]
  %v919 = vld [vmem:[%s3 + $0x20] sm:$0xff]
  %v920 = vld [vmem:[%s3 + $0x28] sm:$0xff]
  %v921 = vld [vmem:[%s3 + $0x30] sm:$0xff]
  %v922 = vld [vmem:[%s3 + $0x38] sm:$0xff]
  %v923 = vld [vmem:[%s3 + $0x40] sm:$0xff]
  %v924 = vld [vmem:[%s3 + $0x48] sm:$0xff]
  %v925 = vld [vmem:[%s3 + $0x50] sm:$0xff]
  %v926 = vld [vmem:[%s3 + $0x58] sm:$0xff]
  %v927 = vld [vmem:[%s3 + $0x60] sm:$0xff]
  %v928 = vld [vmem:[%s3 + $0x68] sm:$0xff]
  %v929 = vld [vmem:[%s3 + $0x70] sm:$0xff]
  %v930 = vld [vmem:[%s3 + $0x78] sm:$0xff]
  %v931 = vld [vmem:[%s3 + $0x80] sm:$0xff]
  %v932 = vld [vmem:[%s3 + $0x88] sm:$0xff]
  %v933 = vld [vmem:[%s3 + $0x90] sm:$0xff]
  %v934 = vld [vmem:[%s3 + $0x98] sm:$0xff]
  %v935 = vld [vmem:[%s3 + $0xa0] sm:$0xff]
  %v936 = vld [vmem:[%s3 + $0xa8] sm:$0xff]
  %v937 = vld [vmem:[%s3 + $0xb0] sm:$0xff]
  %v938 = vld [vmem:[%s3 + $0xb8] sm:$0xff]
  %v939 = vld [vmem:[%s3 + $0xc0] sm:$0xff]
  %v940 = vld [vmem:[%s3 + $0xc8] sm:$0xff]
  %v941 = vld [vmem:[%s3 + $0xd0] sm:$0xff]
  %v942 = vld [vmem:[%s3 + $0xd8] sm:$0xff]
  %v943 = vld [vmem:[%s3 + $0xe0] sm:$0xff]
  %v944 = vld [vmem:[%s3 + $0xe8] sm:$0xff]
  %v945 = vld [vmem:[%s3 + $0xf0] sm:$0xff]
  %v946 = vld [vmem:[%s3 + $0xf8] sm:$0xff]
  %v947 = vld [vmem:[%s3 + $0x100] sm:$0xff]
  %v948 = vld [vmem:[%s3 + $0x108] sm:$0xff]
  %v949 = vld [vmem:[%s3 + $0x110] sm:$0xff]
  %v950 = vld [vmem:[%s3 + $0x118] sm:$0xff]
  %v951 = vld [vmem:[%s3 + $0x120] sm:$0xff]
  %v952 = vld [vmem:[%s3 + $0x128] sm:$0xff]
  %v953 = vld [vmem:[%s3 + $0x130] sm:$0xff]
  %v954 = vld [vmem:[%s3 + $0x138] sm:$0xff]
  %v955 = vld [vmem:[%s3 + $0x140] sm:$0xff]
  %v956 = vld [vmem:[%s3 + $0x148] sm:$0xff]
  %v957 = vld [vmem:[%s3 + $0x150] sm:$0xff]
  %v958 = vld [vmem:[%s3 + $0x158] sm:$0xff]
  %v959 = vld [vmem:[%s3 + $0x160] sm:$0xff]
  %v960 = vld [vmem:[%s3 + $0x168] sm:$0xff]
  %v961 = vld [vmem:[%s3 + $0x170] sm:$0xff]
  %v962 = vld [vmem:[%s3 + $0x178] sm:$0xff]
  %v963 = vld [vmem:[%s3 + $0x180] sm:$0xff]
  %v964 = vld [vmem:[%s3 + $0x188] sm:$0xff]
  %v965 = vld [vmem:[%s3 + $0x190] sm:$0xff]
  %v966 = vld [vmem:[%s3 + $0x198] sm:$0xff]
  %v967 = vld [vmem:[%s3 + $0x1a0] sm:$0xff]
  %v968 = vld [vmem:[%s3 + $0x1a8] sm:$0xff]
  %v969 = vld [vmem:[%s3 + $0x1b0] sm:$0xff]
  %v970 = vld [vmem:[%s3 + $0x1b8] sm:$0xff]
  %v971 = vld [vmem:[%s3 + $0x1c0] sm:$0xff]
  %v972 = vld [vmem:[%s3 + $0x1c8] sm:$0xff]
  %v973 = vld [vmem:[%s3 + $0x1d0] sm:$0xff]
  %v974 = vld [vmem:[%s3 + $0x1d8] sm:$0xff]
  %v975 = vld [vmem:[%s3 + $0x1e0] sm:$0xff]
  %v976 = vld [vmem:[%s3 + $0x1e8] sm:$0xff]
  %v977 = vld [vmem:[%s3 + $0x1f0] sm:$0xff]
  %v978 = vld [vmem:[%s3 + $0x1f8] sm:$0xff]
  %v979 = vld [vmem:[%s3 + $0x200] sm:$0xff]
  %v980 = vld [vmem:[%s3 + $0x208] sm:$0xff]
  %v981 = vld [vmem:[%s3 + $0x210] sm:$0xff]
  %v982 = vld [vmem:[%s3 + $0x218] sm:$0xff]
  %v983 = vld [vmem:[%s3 + $0x220] sm:$0xff]
  %v984 = vld [vmem:[%s3 + $0x228] sm:$0xff]
  %v985 = vld [vmem:[%s3 + $0x230] sm:$0xff]
  %v986 = vld [vmem:[%s3 + $0x238] sm:$0xff]
  %v987 = vunpack.c.l.bf16 %v915
  %v988 = vunpack.c.h.bf16 %v915
  %v989 = vunpack.c.l.bf16 %v916
  %v990 = vunpack.c.h.bf16 %v916
  %v991 = vunpack.c.l.bf16 %v917
  %v992 = vunpack.c.h.bf16 %v917
  %v993 = vunpack.c.l.bf16 %v918
  %v994 = vunpack.c.h.bf16 %v918
  %v995 = vunpack.c.l.bf16 %v919
  %v996 = vunpack.c.h.bf16 %v919
  %v997 = vunpack.c.l.bf16 %v920
  %v998 = vunpack.c.h.bf16 %v920
  %v999 = vunpack.c.l.bf16 %v921
  %v1000 = vunpack.c.h.bf16 %v921
  %v1001 = vunpack.c.l.bf16 %v922
  %v1002 = vunpack.c.h.bf16 %v922
  %v1003 = vunpack.c.l.bf16 %v923
  %v1004 = vunpack.c.h.bf16 %v923
  %v1005 = vunpack.c.l.bf16 %v924
  %v1006 = vunpack.c.h.bf16 %v924
  %v1007 = vunpack.c.l.bf16 %v925
  %v1008 = vunpack.c.h.bf16 %v925
  %v1009 = vunpack.c.l.bf16 %v926
  %v1010 = vunpack.c.h.bf16 %v926
  %v1011 = vunpack.c.l.bf16 %v927
  %v1012 = vunpack.c.h.bf16 %v927
  %v1013 = vunpack.c.l.bf16 %v928
  %v1014 = vunpack.c.h.bf16 %v928
  %v1015 = vunpack.c.l.bf16 %v929
  %v1016 = vunpack.c.h.bf16 %v929
  %v1017 = vunpack.c.l.bf16 %v930
  %v1018 = vunpack.c.h.bf16 %v930
  %v1019 = vunpack.c.l.bf16 %v931
  %v1020 = vunpack.c.h.bf16 %v931
  %v1021 = vunpack.c.l.bf16 %v932
  %v1022 = vunpack.c.h.bf16 %v932
  %v1023 = vunpack.c.l.bf16 %v933
  %v1024 = vunpack.c.h.bf16 %v933
  %v1025 = vunpack.c.l.bf16 %v934
  %v1026 = vunpack.c.h.bf16 %v934
  %v1027 = vunpack.c.l.bf16 %v935
  %v1028 = vunpack.c.h.bf16 %v935
  %v1029 = vunpack.c.l.bf16 %v936
  %v1030 = vunpack.c.h.bf16 %v936
  %v1031 = vunpack.c.l.bf16 %v937
  %v1032 = vunpack.c.h.bf16 %v937
  %v1033 = vunpack.c.l.bf16 %v938
  %v1034 = vunpack.c.h.bf16 %v938
  %v1035 = vunpack.c.l.bf16 %v939
  %v1036 = vunpack.c.h.bf16 %v939
  %v1037 = vunpack.c.l.bf16 %v940
  %v1038 = vunpack.c.h.bf16 %v940
  %v1039 = vunpack.c.l.bf16 %v941
  %v1040 = vunpack.c.h.bf16 %v941
  %v1041 = vunpack.c.l.bf16 %v942
  %v1042 = vunpack.c.h.bf16 %v942
  %v1043 = vunpack.c.l.bf16 %v943
  %v1044 = vunpack.c.h.bf16 %v943
  %v1045 = vunpack.c.l.bf16 %v944
  %v1046 = vunpack.c.h.bf16 %v944
  %v1047 = vunpack.c.l.bf16 %v945
  %v1048 = vunpack.c.h.bf16 %v945
  %v1049 = vunpack.c.l.bf16 %v946
  %v1050 = vunpack.c.h.bf16 %v946
  %v1051 = vunpack.c.l.bf16 %v947
  %v1052 = vunpack.c.h.bf16 %v947
  %v1053 = vunpack.c.l.bf16 %v948
  %v1054 = vunpack.c.h.bf16 %v948
  %v1055 = vunpack.c.l.bf16 %v949
  %v1056 = vunpack.c.h.bf16 %v949
  %v1057 = vunpack.c.l.bf16 %v950
  %v1058 = vunpack.c.h.bf16 %v950
  %v1059 = vunpack.c.l.bf16 %v951
  %v1060 = vunpack.c.h.bf16 %v951
  %v1061 = vunpack.c.l.bf16 %v952
  %v1062 = vunpack.c.h.bf16 %v952
  %v1063 = vunpack.c.l.bf16 %v953
  %v1064 = vunpack.c.h.bf16 %v953
  %v1065 = vunpack.c.l.bf16 %v954
  %v1066 = vunpack.c.h.bf16 %v954
  %v1067 = vunpack.c.l.bf16 %v955
  %v1068 = vunpack.c.h.bf16 %v955
  %v1069 = vunpack.c.l.bf16 %v956
  %v1070 = vunpack.c.h.bf16 %v956
  %v1071 = vunpack.c.l.bf16 %v957
  %v1072 = vunpack.c.h.bf16 %v957
  %v1073 = vunpack.c.l.bf16 %v958
  %v1074 = vunpack.c.h.bf16 %v958
  %v1075 = vunpack.c.l.bf16 %v959
  %v1076 = vunpack.c.h.bf16 %v959
  %v1077 = vunpack.c.l.bf16 %v960
  %v1078 = vunpack.c.h.bf16 %v960
  %v1079 = vunpack.c.l.bf16 %v961
  %v1080 = vunpack.c.h.bf16 %v961
  %v1081 = vunpack.c.l.bf16 %v962
  %v1082 = vunpack.c.h.bf16 %v962
  %v1083 = vunpack.c.l.bf16 %v963
  %v1084 = vunpack.c.h.bf16 %v963
  %v1085 = vunpack.c.l.bf16 %v964
  %v1086 = vunpack.c.h.bf16 %v964
  %v1087 = vunpack.c.l.bf16 %v965
  %v1088 = vunpack.c.h.bf16 %v965
  %v1089 = vunpack.c.l.bf16 %v966
  %v1090 = vunpack.c.h.bf16 %v966
  %v1091 = vunpack.c.l.bf16 %v967
  %v1092 = vunpack.c.h.bf16 %v967
  %v1093 = vunpack.c.l.bf16 %v968
  %v1094 = vunpack.c.h.bf16 %v968
  %v1095 = vunpack.c.l.bf16 %v969
  %v1096 = vunpack.c.h.bf16 %v969
  %v1097 = vunpack.c.l.bf16 %v970
  %v1098 = vunpack.c.h.bf16 %v970
  %v1099 = vunpack.c.l.bf16 %v971
  %v1100 = vunpack.c.h.bf16 %v971
  %v1101 = vunpack.c.l.bf16 %v972
  %v1102 = vunpack.c.h.bf16 %v972
  %v1103 = vunpack.c.l.bf16 %v973
  %v1104 = vunpack.c.h.bf16 %v973
  %v1105 = vunpack.c.l.bf16 %v974
  %v1106 = vunpack.c.h.bf16 %v974
  %v1107 = vunpack.c.l.bf16 %v975
  %v1108 = vunpack.c.h.bf16 %v975
  %v1109 = vunpack.c.l.bf16 %v976
  %v1110 = vunpack.c.h.bf16 %v976
  %v1111 = vunpack.c.l.bf16 %v977
  %v1112 = vunpack.c.h.bf16 %v977
  %v1113 = vunpack.c.l.bf16 %v978
  %v1114 = vunpack.c.h.bf16 %v978
  %v1115 = vunpack.c.l.bf16 %v979
  %v1116 = vunpack.c.h.bf16 %v979
  %v1117 = vunpack.c.l.bf16 %v980
  %v1118 = vunpack.c.h.bf16 %v980
  %v1119 = vunpack.c.l.bf16 %v981
  %v1120 = vunpack.c.h.bf16 %v981
  %v1121 = vunpack.c.l.bf16 %v982
  %v1122 = vunpack.c.h.bf16 %v982
  %v1123 = vunpack.c.l.bf16 %v983
  %v1124 = vunpack.c.h.bf16 %v983
  %v1125 = vunpack.c.l.bf16 %v984
  %v1126 = vunpack.c.h.bf16 %v984
  %v1127 = vunpack.c.l.bf16 %v985
  %v1128 = vunpack.c.h.bf16 %v985
  %v1129 = vunpack.c.l.bf16 %v986
  %v1130 = vunpack.c.h.bf16 %v986
  %v1131 = vmul.f32 %v771, %v987
  %v1132 = vmul.f32 %v772, %v988
  %v1133 = vmul.f32 %v773, %v989
  %v1134 = vmul.f32 %v774, %v990
  %v1135 = vmul.f32 %v775, %v991
  %v1136 = vmul.f32 %v776, %v992
  %v1137 = vmul.f32 %v777, %v993
  %v1138 = vmul.f32 %v778, %v994
  %v1139 = vmul.f32 %v779, %v995
  %v1140 = vmul.f32 %v780, %v996
  %v1141 = vmul.f32 %v781, %v997
  %v1142 = vmul.f32 %v782, %v998
  %v1143 = vmul.f32 %v783, %v999
  %v1144 = vmul.f32 %v784, %v1000
  %v1145 = vmul.f32 %v785, %v1001
  %v1146 = vmul.f32 %v786, %v1002
  %v1147 = vmul.f32 %v787, %v1003
  %v1148 = vmul.f32 %v788, %v1004
  %v1149 = vmul.f32 %v789, %v1005
  %v1150 = vmul.f32 %v790, %v1006
  %v1151 = vmul.f32 %v791, %v1007
  %v1152 = vmul.f32 %v792, %v1008
  %v1153 = vmul.f32 %v793, %v1009
  %v1154 = vmul.f32 %v794, %v1010
  %v1155 = vmul.f32 %v795, %v1011
  %v1156 = vmul.f32 %v796, %v1012
  %v1157 = vmul.f32 %v797, %v1013
  %v1158 = vmul.f32 %v798, %v1014
  %v1159 = vmul.f32 %v799, %v1015
  %v1160 = vmul.f32 %v800, %v1016
  %v1161 = vmul.f32 %v801, %v1017
  %v1162 = vmul.f32 %v802, %v1018
  %v1163 = vmul.f32 %v803, %v1019
  %v1164 = vmul.f32 %v804, %v1020
  %v1165 = vmul.f32 %v805, %v1021
  %v1166 = vmul.f32 %v806, %v1022
  %v1167 = vmul.f32 %v807, %v1023
  %v1168 = vmul.f32 %v808, %v1024
  %v1169 = vmul.f32 %v809, %v1025
  %v1170 = vmul.f32 %v810, %v1026
  %v1171 = vmul.f32 %v811, %v1027
  %v1172 = vmul.f32 %v812, %v1028
  %v1173 = vmul.f32 %v813, %v1029
  %v1174 = vmul.f32 %v814, %v1030
  %v1175 = vmul.f32 %v815, %v1031
  %v1176 = vmul.f32 %v816, %v1032
  %v1177 = vmul.f32 %v817, %v1033
  %v1178 = vmul.f32 %v818, %v1034
  %v1179 = vmul.f32 %v819, %v1035
  %v1180 = vmul.f32 %v820, %v1036
  %v1181 = vmul.f32 %v821, %v1037
  %v1182 = vmul.f32 %v822, %v1038
  %v1183 = vmul.f32 %v823, %v1039
  %v1184 = vmul.f32 %v824, %v1040
  %v1185 = vmul.f32 %v825, %v1041
  %v1186 = vmul.f32 %v826, %v1042
  %v1187 = vmul.f32 %v827, %v1043
  %v1188 = vmul.f32 %v828, %v1044
  %v1189 = vmul.f32 %v829, %v1045
  %v1190 = vmul.f32 %v830, %v1046
  %v1191 = vmul.f32 %v831, %v1047
  %v1192 = vmul.f32 %v832, %v1048
  %v1193 = vmul.f32 %v833, %v1049
  %v1194 = vmul.f32 %v834, %v1050
  %v1195 = vmul.f32 %v835, %v1051
  %v1196 = vmul.f32 %v836, %v1052
  %v1197 = vmul.f32 %v837, %v1053
  %v1198 = vmul.f32 %v838, %v1054
  %v1199 = vmul.f32 %v839, %v1055
  %v1200 = vmul.f32 %v840, %v1056
  %v1201 = vmul.f32 %v841, %v1057
  %v1202 = vmul.f32 %v842, %v1058
  %v1203 = vmul.f32 %v843, %v1059
  %v1204 = vmul.f32 %v844, %v1060
  %v1205 = vmul.f32 %v845, %v1061
  %v1206 = vmul.f32 %v846, %v1062
  %v1207 = vmul.f32 %v847, %v1063
  %v1208 = vmul.f32 %v848, %v1064
  %v1209 = vmul.f32 %v849, %v1065
  %v1210 = vmul.f32 %v850, %v1066
  %v1211 = vmul.f32 %v851, %v1067
  %v1212 = vmul.f32 %v852, %v1068
  %v1213 = vmul.f32 %v853, %v1069
  %v1214 = vmul.f32 %v854, %v1070
  %v1215 = vmul.f32 %v855, %v1071
  %v1216 = vmul.f32 %v856, %v1072
  %v1217 = vmul.f32 %v857, %v1073
  %v1218 = vmul.f32 %v858, %v1074
  %v1219 = vmul.f32 %v859, %v1075
  %v1220 = vmul.f32 %v860, %v1076
  %v1221 = vmul.f32 %v861, %v1077
  %v1222 = vmul.f32 %v862, %v1078
  %v1223 = vmul.f32 %v863, %v1079
  %v1224 = vmul.f32 %v864, %v1080
  %v1225 = vmul.f32 %v865, %v1081
  %v1226 = vmul.f32 %v866, %v1082
  %v1227 = vmul.f32 %v867, %v1083
  %v1228 = vmul.f32 %v868, %v1084
  %v1229 = vmul.f32 %v869, %v1085
  %v1230 = vmul.f32 %v870, %v1086
  %v1231 = vmul.f32 %v871, %v1087
  %v1232 = vmul.f32 %v872, %v1088
  %v1233 = vmul.f32 %v873, %v1089
  %v1234 = vmul.f32 %v874, %v1090
  %v1235 = vmul.f32 %v875, %v1091
  %v1236 = vmul.f32 %v876, %v1092
  %v1237 = vmul.f32 %v877, %v1093
  %v1238 = vmul.f32 %v878, %v1094
  %v1239 = vmul.f32 %v879, %v1095
  %v1240 = vmul.f32 %v880, %v1096
  %v1241 = vmul.f32 %v881, %v1097
  %v1242 = vmul.f32 %v882, %v1098
  %v1243 = vmul.f32 %v883, %v1099
  %v1244 = vmul.f32 %v884, %v1100
  %v1245 = vmul.f32 %v885, %v1101
  %v1246 = vmul.f32 %v886, %v1102
  %v1247 = vmul.f32 %v887, %v1103
  %v1248 = vmul.f32 %v888, %v1104
  %v1249 = vmul.f32 %v889, %v1105
  %v1250 = vmul.f32 %v890, %v1106
  %v1251 = vmul.f32 %v891, %v1107
  %v1252 = vmul.f32 %v892, %v1108
  %v1253 = vmul.f32 %v893, %v1109
  %v1254 = vmul.f32 %v894, %v1110
  %v1255 = vmul.f32 %v895, %v1111
  %v1256 = vmul.f32 %v896, %v1112
  %v1257 = vmul.f32 %v897, %v1113
  %v1258 = vmul.f32 %v898, %v1114
  %v1259 = vmul.f32 %v899, %v1115
  %v1260 = vmul.f32 %v900, %v1116
  %v1261 = vmul.f32 %v901, %v1117
  %v1262 = vmul.f32 %v902, %v1118
  %v1263 = vmul.f32 %v903, %v1119
  %v1264 = vmul.f32 %v904, %v1120
  %v1265 = vmul.f32 %v905, %v1121
  %v1266 = vmul.f32 %v906, %v1122
  %v1267 = vmul.f32 %v907, %v1123
  %v1268 = vmul.f32 %v908, %v1124
  %v1269 = vmul.f32 %v909, %v1125
  %v1270 = vmul.f32 %v910, %v1126
  %v1271 = vmul.f32 %v911, %v1127
  %v1272 = vmul.f32 %v912, %v1128
  %v1273 = vmul.f32 %v913, %v1129
  %v1274 = vmul.f32 %v914, %v1130
  %v1275 = vld [vmem:[%s4] sm:$0xff]
  %v1276 = vld [vmem:[%s4 + $0x8] sm:$0xff]
  %v1277 = vld [vmem:[%s4 + $0x10] sm:$0xff]
  %vm1278 = vcmask 261120
  %v1280 = vsel %vm1278, %v1277, 0
  %1282 = vmatpush.msra.mxu0 %v1191
  %1283 = vmatpush.msra.mxu0 %v1187
  %1284 = vmatpush.msra.mxu0 %v1183
  %1285 = vmatpush.msra.mxu0 %v1179
  %1286 = vmatpush.msra.mxu0 %v1175
  %1287 = vmatpush.msra.mxu0 %v1171
  %1288 = vmatpush.msra.mxu0 %v1167
  %1289 = vmatpush.msra.mxu0 %v1163
  %1290 = vmatpush.msra.mxu0 %v1159
  %1291 = vmatpush.msra.mxu0 %v1155
  %1292 = vmatpush.msra.mxu0 %v1151
  %1293 = vmatpush.msra.mxu0 %v1147
  %1294 = vmatpush.msra.mxu0 %v1143
  %1295 = vmatpush.msra.mxu0 %v1139
  %1296 = vmatpush.msra.mxu0 %v1135
  %1297 = vmatpush.msra.mxu0 %v1131
  %1298 = vmatmul.f32.gmra.mxu0 %v1275
  %v1299 = vpop.f32.mrf.mxu0
  %v1300 = vadd.f32 0.0, %v1299
  %1301 = vdwg.mxu0
  %1302 = vmatpush.msra.mxu0 %v1255
  %1303 = vmatpush.msra.mxu0 %v1251
  %1304 = vmatpush.msra.mxu0 %v1247
  %1305 = vmatpush.msra.mxu0 %v1243
  %1306 = vmatpush.msra.mxu0 %v1239
  %1307 = vmatpush.msra.mxu0 %v1235
  %1308 = vmatpush.msra.mxu0 %v1231
  %1309 = vmatpush.msra.mxu0 %v1227
  %1310 = vmatpush.msra.mxu0 %v1223
  %1311 = vmatpush.msra.mxu0 %v1219
  %1312 = vmatpush.msra.mxu0 %v1215
  %1313 = vmatpush.msra.mxu0 %v1211
  %1314 = vmatpush.msra.mxu0 %v1207
  %1315 = vmatpush.msra.mxu0 %v1203
  %1316 = vmatpush.msra.mxu0 %v1199
  %1317 = vmatpush.msra.mxu0 %v1195
  %1318 = vmatmul.f32.gmra.mxu0 %v1276
  %v1319 = vpop.f32.mrf.mxu0
  %v1320 = vadd.f32 %v1300, %v1319
  %1321 = vdwg.mxu0
  %1322 = vmatpush.msra.mxu0 0.0
  %1323 = vmatpush.msra.mxu0 0.0
  %1324 = vmatpush.msra.mxu0 0.0
  %1325 = vmatpush.msra.mxu0 0.0
  %1326 = vmatpush.msra.mxu0 0.0
  %1327 = vmatpush.msra.mxu0 0.0
  %1328 = vmatpush.msra.mxu0 0.0
  %1329 = vmatpush.msra.mxu0 0.0
  %1330 = vmatpush.msra.mxu0 0.0
  %1331 = vmatpush.msra.mxu0 0.0
  %1332 = vmatpush.msra.mxu0 0.0
  %1333 = vmatpush.msra.mxu0 0.0
  %1334 = vmatpush.msra.mxu0 %v1271
  %1335 = vmatpush.msra.mxu0 %v1267
  %1336 = vmatpush.msra.mxu0 %v1263
  %1337 = vmatpush.msra.mxu0 %v1259
  %1338 = vmatmul.f32.gmra.mxu0 %v1280
  %v1339 = vpop.f32.mrf.mxu0
  %v1340 = vadd.f32 %v1320, %v1339
  %1341 = vdwg.mxu0
  %1342 = vmatpush.msra.mxu0 %v1192
  %1343 = vmatpush.msra.mxu0 %v1188
  %1344 = vmatpush.msra.mxu0 %v1184
  %1345 = vmatpush.msra.mxu0 %v1180
  %1346 = vmatpush.msra.mxu0 %v1176
  %1347 = vmatpush.msra.mxu0 %v1172
  %1348 = vmatpush.msra.mxu0 %v1168
  %1349 = vmatpush.msra.mxu0 %v1164
  %1350 = vmatpush.msra.mxu0 %v1160
  %1351 = vmatpush.msra.mxu0 %v1156
  %1352 = vmatpush.msra.mxu0 %v1152
  %1353 = vmatpush.msra.mxu0 %v1148
  %1354 = vmatpush.msra.mxu0 %v1144
  %1355 = vmatpush.msra.mxu0 %v1140
  %1356 = vmatpush.msra.mxu0 %v1136
  %1357 = vmatpush.msra.mxu0 %v1132
  %1358 = vmatmul.f32.gmra.mxu0 %v1275
  %v1359 = vpop.f32.mrf.mxu0
  %v1360 = vadd.f32 0.0, %v1359
  %1361 = vdwg.mxu0
  %1362 = vmatpush.msra.mxu0 %v1256
  %1363 = vmatpush.msra.mxu0 %v1252
  %1364 = vmatpush.msra.mxu0 %v1248
  %1365 = vmatpush.msra.mxu0 %v1244
  %1366 = vmatpush.msra.mxu0 %v1240
  %1367 = vmatpush.msra.mxu0 %v1236
  %1368 = vmatpush.msra.mxu0 %v1232
  %1369 = vmatpush.msra.mxu0 %v1228
  %1370 = vmatpush.msra.mxu0 %v1224
  %1371 = vmatpush.msra.mxu0 %v1220
  %1372 = vmatpush.msra.mxu0 %v1216
  %1373 = vmatpush.msra.mxu0 %v1212
  %1374 = vmatpush.msra.mxu0 %v1208
  %1375 = vmatpush.msra.mxu0 %v1204
  %1376 = vmatpush.msra.mxu0 %v1200
  %1377 = vmatpush.msra.mxu0 %v1196
  %1378 = vmatmul.f32.gmra.mxu0 %v1276
  %v1379 = vpop.f32.mrf.mxu0
  %v1380 = vadd.f32 %v1360, %v1379
  %1381 = vdwg.mxu0
  %1382 = vmatpush.msra.mxu0 0.0
  %1383 = vmatpush.msra.mxu0 0.0
  %1384 = vmatpush.msra.mxu0 0.0
  %1385 = vmatpush.msra.mxu0 0.0
  %1386 = vmatpush.msra.mxu0 0.0
  %1387 = vmatpush.msra.mxu0 0.0
  %1388 = vmatpush.msra.mxu0 0.0
  %1389 = vmatpush.msra.mxu0 0.0
  %1390 = vmatpush.msra.mxu0 0.0
  %1391 = vmatpush.msra.mxu0 0.0
  %1392 = vmatpush.msra.mxu0 0.0
  %1393 = vmatpush.msra.mxu0 0.0
  %1394 = vmatpush.msra.mxu0 %v1272
  %1395 = vmatpush.msra.mxu0 %v1268
  %1396 = vmatpush.msra.mxu0 %v1264
  %1397 = vmatpush.msra.mxu0 %v1260
  %1398 = vmatmul.f32.gmra.mxu0 %v1280
  %v1399 = vpop.f32.mrf.mxu0
  %v1400 = vadd.f32 %v1380, %v1399
  %1401 = vdwg.mxu0
  %1402 = vmatpush.msra.mxu0 %v1193
  %1403 = vmatpush.msra.mxu0 %v1189
  %1404 = vmatpush.msra.mxu0 %v1185
  %1405 = vmatpush.msra.mxu0 %v1181
  %1406 = vmatpush.msra.mxu0 %v1177
  %1407 = vmatpush.msra.mxu0 %v1173
  %1408 = vmatpush.msra.mxu0 %v1169
  %1409 = vmatpush.msra.mxu0 %v1165
  %1410 = vmatpush.msra.mxu0 %v1161
  %1411 = vmatpush.msra.mxu0 %v1157
  %1412 = vmatpush.msra.mxu0 %v1153
  %1413 = vmatpush.msra.mxu0 %v1149
  %1414 = vmatpush.msra.mxu0 %v1145
  %1415 = vmatpush.msra.mxu0 %v1141
  %1416 = vmatpush.msra.mxu0 %v1137
  %1417 = vmatpush.msra.mxu0 %v1133
  %1418 = vmatmul.f32.gmra.mxu0 %v1275
  %v1419 = vpop.f32.mrf.mxu0
  %v1420 = vadd.f32 0.0, %v1419
  %1421 = vdwg.mxu0
  %1422 = vmatpush.msra.mxu0 %v1257
  %1423 = vmatpush.msra.mxu0 %v1253
  %1424 = vmatpush.msra.mxu0 %v1249
  %1425 = vmatpush.msra.mxu0 %v1245
  %1426 = vmatpush.msra.mxu0 %v1241
  %1427 = vmatpush.msra.mxu0 %v1237
  %1428 = vmatpush.msra.mxu0 %v1233
  %1429 = vmatpush.msra.mxu0 %v1229
  %1430 = vmatpush.msra.mxu0 %v1225
  %1431 = vmatpush.msra.mxu0 %v1221
  %1432 = vmatpush.msra.mxu0 %v1217
  %1433 = vmatpush.msra.mxu0 %v1213
  %1434 = vmatpush.msra.mxu0 %v1209
  %1435 = vmatpush.msra.mxu0 %v1205
  %1436 = vmatpush.msra.mxu0 %v1201
  %1437 = vmatpush.msra.mxu0 %v1197
  %1438 = vmatmul.f32.gmra.mxu0 %v1276
  %v1439 = vpop.f32.mrf.mxu0
  %v1440 = vadd.f32 %v1420, %v1439
  %1441 = vdwg.mxu0
  %1442 = vmatpush.msra.mxu0 0.0
  %1443 = vmatpush.msra.mxu0 0.0
  %1444 = vmatpush.msra.mxu0 0.0
  %1445 = vmatpush.msra.mxu0 0.0
  %1446 = vmatpush.msra.mxu0 0.0
  %1447 = vmatpush.msra.mxu0 0.0
  %1448 = vmatpush.msra.mxu0 0.0
  %1449 = vmatpush.msra.mxu0 0.0
  %1450 = vmatpush.msra.mxu0 0.0
  %1451 = vmatpush.msra.mxu0 0.0
  %1452 = vmatpush.msra.mxu0 0.0
  %1453 = vmatpush.msra.mxu0 0.0
  %1454 = vmatpush.msra.mxu0 %v1273
  %1455 = vmatpush.msra.mxu0 %v1269
  %1456 = vmatpush.msra.mxu0 %v1265
  %1457 = vmatpush.msra.mxu0 %v1261
  %1458 = vmatmul.f32.gmra.mxu0 %v1280
  %v1459 = vpop.f32.mrf.mxu0
  %v1460 = vadd.f32 %v1440, %v1459
  %1461 = vdwg.mxu0
  %1462 = vmatpush.msra.mxu0 %v1194
  %1463 = vmatpush.msra.mxu0 %v1190
  %1464 = vmatpush.msra.mxu0 %v1186
  %1465 = vmatpush.msra.mxu0 %v1182
  %1466 = vmatpush.msra.mxu0 %v1178
  %1467 = vmatpush.msra.mxu0 %v1174
  %1468 = vmatpush.msra.mxu0 %v1170
  %1469 = vmatpush.msra.mxu0 %v1166
  %1470 = vmatpush.msra.mxu0 %v1162
  %1471 = vmatpush.msra.mxu0 %v1158
  %1472 = vmatpush.msra.mxu0 %v1154
  %1473 = vmatpush.msra.mxu0 %v1150
  %1474 = vmatpush.msra.mxu0 %v1146
  %1475 = vmatpush.msra.mxu0 %v1142
  %1476 = vmatpush.msra.mxu0 %v1138
  %1477 = vmatpush.msra.mxu0 %v1134
  %1478 = vmatmul.f32.gmra.mxu0 %v1275
  %v1479 = vpop.f32.mrf.mxu0
  %v1480 = vadd.f32 0.0, %v1479
  %1481 = vdwg.mxu0
  %1482 = vmatpush.msra.mxu0 %v1258
  %1483 = vmatpush.msra.mxu0 %v1254
  %1484 = vmatpush.msra.mxu0 %v1250
  %1485 = vmatpush.msra.mxu0 %v1246
  %1486 = vmatpush.msra.mxu0 %v1242
  %1487 = vmatpush.msra.mxu0 %v1238
  %1488 = vmatpush.msra.mxu0 %v1234
  %1489 = vmatpush.msra.mxu0 %v1230
  %1490 = vmatpush.msra.mxu0 %v1226
  %1491 = vmatpush.msra.mxu0 %v1222
  %1492 = vmatpush.msra.mxu0 %v1218
  %1493 = vmatpush.msra.mxu0 %v1214
  %1494 = vmatpush.msra.mxu0 %v1210
  %1495 = vmatpush.msra.mxu0 %v1206
  %1496 = vmatpush.msra.mxu0 %v1202
  %1497 = vmatpush.msra.mxu0 %v1198
  %1498 = vmatmul.f32.gmra.mxu0 %v1276
  %v1499 = vpop.f32.mrf.mxu0
  %v1500 = vadd.f32 %v1480, %v1499
  %1501 = vdwg.mxu0
  %1502 = vmatpush.msra.mxu0 0.0
  %1503 = vmatpush.msra.mxu0 0.0
  %1504 = vmatpush.msra.mxu0 0.0
  %1505 = vmatpush.msra.mxu0 0.0
  %1506 = vmatpush.msra.mxu0 0.0
  %1507 = vmatpush.msra.mxu0 0.0
  %1508 = vmatpush.msra.mxu0 0.0
  %1509 = vmatpush.msra.mxu0 0.0
  %1510 = vmatpush.msra.mxu0 0.0
  %1511 = vmatpush.msra.mxu0 0.0
  %1512 = vmatpush.msra.mxu0 0.0
  %1513 = vmatpush.msra.mxu0 0.0
  %1514 = vmatpush.msra.mxu0 %v1274
  %1515 = vmatpush.msra.mxu0 %v1270
  %1516 = vmatpush.msra.mxu0 %v1266
  %1517 = vmatpush.msra.mxu0 %v1262
  %1518 = vmatmul.f32.gmra.mxu0 %v1280
  %v1519 = vpop.f32.mrf.mxu0
  %v1520 = vadd.f32 %v1500, %v1519
  %1521 = vdwg.mxu0
  %v1522 = vpack.c.bf16 %v1340, %v1340
  %v1523 = vpack.c.bf16 %v1400, %v1400
  %v1524 = vpack.c.bf16 %v1460, %v1460
  %v1525 = vpack.c.bf16 %v1520, %v1520
  %v1526 = vld [vmem:[%s5] sm:$0xff]
  %v1527 = vld [vmem:[%s5 + $0x8] sm:$0xff]
  %v1528 = vld [vmem:[%s5 + $0x10] sm:$0xff]
  %v1529 = vld [vmem:[%s5 + $0x18] sm:$0xff]
  %v1530 = vld [vmem:[%s5 + $0x20] sm:$0xff]
  %v1531 = vld [vmem:[%s5 + $0x28] sm:$0xff]
  %v1532 = vld [vmem:[%s5 + $0x30] sm:$0xff]
  %v1533 = vld [vmem:[%s5 + $0x38] sm:$0xff]
  %v1534 = vld [vmem:[%s5 + $0x40] sm:$0xff]
  %v1535 = vld [vmem:[%s5 + $0x48] sm:$0xff]
  %v1536 = vld [vmem:[%s5 + $0x50] sm:$0xff]
  %v1537 = vld [vmem:[%s5 + $0x58] sm:$0xff]
  %v1538 = vld [vmem:[%s5 + $0x60] sm:$0xff]
  %v1539 = vld [vmem:[%s5 + $0x68] sm:$0xff]
  %v1540 = vld [vmem:[%s5 + $0x70] sm:$0xff]
  %v1541 = vld [vmem:[%s5 + $0x78] sm:$0xff]
  %v1542 = vld [vmem:[%s5 + $0x80] sm:$0xff]
  %v1543 = vld [vmem:[%s5 + $0x88] sm:$0xff]
  %v1544 = vld [vmem:[%s5 + $0x90] sm:$0xff]
  %v1545 = vld [vmem:[%s5 + $0x98] sm:$0xff]
  %v1546 = vld [vmem:[%s5 + $0xa0] sm:$0xff]
  %v1547 = vld [vmem:[%s5 + $0xa8] sm:$0xff]
  %v1548 = vld [vmem:[%s5 + $0xb0] sm:$0xff]
  %v1549 = vld [vmem:[%s5 + $0xb8] sm:$0xff]
  %v1550 = vld [vmem:[%s5 + $0xc0] sm:$0xff]
  %v1551 = vld [vmem:[%s5 + $0xc8] sm:$0xff]
  %v1552 = vld [vmem:[%s5 + $0xd0] sm:$0xff]
  %v1553 = vld [vmem:[%s5 + $0xd8] sm:$0xff]
  %v1554 = vld [vmem:[%s5 + $0xe0] sm:$0xff]
  %v1555 = vld [vmem:[%s5 + $0xe8] sm:$0xff]
  %v1556 = vld [vmem:[%s5 + $0xf0] sm:$0xff]
  %v1557 = vld [vmem:[%s5 + $0xf8] sm:$0xff]
  %v1558 = vld [vmem:[%s5 + $0x100] sm:$0xff]
  %v1559 = vld [vmem:[%s5 + $0x108] sm:$0xff]
  %v1560 = vld [vmem:[%s5 + $0x110] sm:$0xff]
  %v1561 = vld [vmem:[%s5 + $0x118] sm:$0xff]
  %v1562 = vld [vmem:[%s5 + $0x120] sm:$0xff]
  %v1563 = vld [vmem:[%s5 + $0x128] sm:$0xff]
  %v1564 = vld [vmem:[%s5 + $0x130] sm:$0xff]
  %v1565 = vld [vmem:[%s5 + $0x138] sm:$0xff]
  %v1566 = vld [vmem:[%s5 + $0x140] sm:$0xff]
  %v1567 = vld [vmem:[%s5 + $0x148] sm:$0xff]
  %v1568 = vld [vmem:[%s5 + $0x150] sm:$0xff]
  %v1569 = vld [vmem:[%s5 + $0x158] sm:$0xff]
  %v1570 = vld [vmem:[%s5 + $0x160] sm:$0xff]
  %v1571 = vld [vmem:[%s5 + $0x168] sm:$0xff]
  %v1572 = vld [vmem:[%s5 + $0x170] sm:$0xff]
  %v1573 = vld [vmem:[%s5 + $0x178] sm:$0xff]
  %v1574 = vld [vmem:[%s5 + $0x180] sm:$0xff]
  %v1575 = vld [vmem:[%s5 + $0x188] sm:$0xff]
  %v1576 = vld [vmem:[%s5 + $0x190] sm:$0xff]
  %v1577 = vld [vmem:[%s5 + $0x198] sm:$0xff]
  %v1578 = vld [vmem:[%s5 + $0x1a0] sm:$0xff]
  %v1579 = vld [vmem:[%s5 + $0x1a8] sm:$0xff]
  %v1580 = vld [vmem:[%s6] sm:$0x3]
  %v1582 = vperm.slane %v1580, 0
  %v1583 = vperm.slane %v1580, 1
  %v1640 = vunpack.c.l.b16 %v1526
  %v1641 = vunpack.c.h.b16 %v1526
  %v1642 = vunpack.c.l.b16 %v1527
  %v1643 = vunpack.c.h.b16 %v1527
  %v1644 = vunpack.c.l.b16 %v1528
  %v1645 = vunpack.c.h.b16 %v1528
  %v1646 = vunpack.c.l.b16 %v1529
  %v1647 = vunpack.c.h.b16 %v1529
  %v1648 = vunpack.c.l.b16 %v1530
  %v1649 = vunpack.c.h.b16 %v1530
  %v1650 = vunpack.c.l.b16 %v1531
  %v1651 = vunpack.c.h.b16 %v1531
  %v1652 = vunpack.c.l.b16 %v1532
  %v1653 = vunpack.c.h.b16 %v1532
  %v1654 = vunpack.c.l.b16 %v1533
  %v1655 = vunpack.c.h.b16 %v1533
  %v1656 = vunpack.c.l.b16 %v1534
  %v1657 = vunpack.c.h.b16 %v1534
  %v1658 = vunpack.c.l.b16 %v1535
  %v1659 = vunpack.c.h.b16 %v1535
  %v1660 = vunpack.c.l.b16 %v1536
  %v1661 = vunpack.c.h.b16 %v1536
  %v1662 = vunpack.c.l.b16 %v1537
  %v1663 = vunpack.c.h.b16 %v1537
  %v1664 = vunpack.c.l.b16 %v1538
  %v1665 = vunpack.c.h.b16 %v1538
  %v1666 = vunpack.c.l.b16 %v1539
  %v1667 = vunpack.c.h.b16 %v1539
  %v1668 = vunpack.c.l.b16 %v1540
  %v1669 = vunpack.c.h.b16 %v1540
  %v1670 = vunpack.c.l.b16 %v1541
  %v1671 = vunpack.c.h.b16 %v1541
  %v1672 = vunpack.c.l.b16 %v1542
  %v1673 = vunpack.c.h.b16 %v1542
  %v1674 = vunpack.c.l.b16 %v1543
  %v1675 = vunpack.c.h.b16 %v1543
  %v1676 = vunpack.c.l.b16 %v1544
  %v1677 = vunpack.c.h.b16 %v1544
  %v1678 = vunpack.c.l.b16 %v1545
  %v1679 = vunpack.c.h.b16 %v1545
  %v1680 = vunpack.c.l.b16 %v1546
  %v1681 = vunpack.c.h.b16 %v1546
  %v1682 = vunpack.c.l.b16 %v1547
  %v1683 = vunpack.c.h.b16 %v1547
  %v1684 = vunpack.c.l.b16 %v1548
  %v1685 = vunpack.c.h.b16 %v1548
  %v1686 = vunpack.c.l.b16 %v1549
  %v1687 = vunpack.c.h.b16 %v1549
  %v1688 = vunpack.c.l.b16 %v1550
  %v1689 = vunpack.c.h.b16 %v1550
  %v1690 = vunpack.c.l.b16 %v1551
  %v1691 = vunpack.c.h.b16 %v1551
  %v1692 = vunpack.c.l.b16 %v1552
  %v1693 = vunpack.c.h.b16 %v1552
  %v1694 = vunpack.c.l.b16 %v1553
  %v1695 = vunpack.c.h.b16 %v1553
  %v1696 = vunpack.c.l.b16 %v1554
  %v1697 = vunpack.c.h.b16 %v1554
  %v1698 = vunpack.c.l.b16 %v1555
  %v1699 = vunpack.c.h.b16 %v1555
  %v1700 = vunpack.c.l.b16 %v1556
  %v1701 = vunpack.c.h.b16 %v1556
  %v1702 = vunpack.c.l.b16 %v1557
  %v1703 = vunpack.c.h.b16 %v1557
  %v1704 = vunpack.c.l.b16 %v1558
  %v1705 = vunpack.c.h.b16 %v1558
  %v1706 = vunpack.c.l.b16 %v1559
  %v1707 = vunpack.c.h.b16 %v1559
  %v1708 = vunpack.c.l.b16 %v1560
  %v1709 = vunpack.c.h.b16 %v1560
  %v1710 = vunpack.c.l.b16 %v1561
  %v1711 = vunpack.c.h.b16 %v1561
  %v1712 = vunpack.c.l.b16 %v1562
  %v1713 = vunpack.c.h.b16 %v1562
  %v1714 = vunpack.c.l.b16 %v1563
  %v1715 = vunpack.c.h.b16 %v1563
  %v1716 = vunpack.c.l.b16 %v1564
  %v1717 = vunpack.c.h.b16 %v1564
  %v1718 = vunpack.c.l.b16 %v1565
  %v1719 = vunpack.c.h.b16 %v1565
  %v1720 = vunpack.c.l.b16 %v1566
  %v1721 = vunpack.c.h.b16 %v1566
  %v1722 = vunpack.c.l.b16 %v1567
  %v1723 = vunpack.c.h.b16 %v1567
  %v1724 = vunpack.c.l.b16 %v1568
  %v1725 = vunpack.c.h.b16 %v1568
  %v1726 = vunpack.c.l.b16 %v1569
  %v1727 = vunpack.c.h.b16 %v1569
  %v1728 = vunpack.c.l.b16 %v1570
  %v1729 = vunpack.c.h.b16 %v1570
  %v1730 = vunpack.c.l.b16 %v1571
  %v1731 = vunpack.c.h.b16 %v1571
  %v1732 = vunpack.c.l.b16 %v1572
  %v1733 = vunpack.c.h.b16 %v1572
  %v1734 = vunpack.c.l.b16 %v1573
  %v1735 = vunpack.c.h.b16 %v1573
  %v1736 = vunpack.c.l.b16 %v1574
  %v1737 = vunpack.c.h.b16 %v1574
  %v1738 = vunpack.c.l.b16 %v1575
  %v1739 = vunpack.c.h.b16 %v1575
  %v1740 = vunpack.c.l.b16 %v1576
  %v1741 = vunpack.c.h.b16 %v1576
  %v1742 = vunpack.c.l.b16 %v1577
  %v1743 = vunpack.c.h.b16 %v1577
  %v1744 = vunpack.c.l.b16 %v1578
  %v1745 = vunpack.c.h.b16 %v1578
  %v1746 = vunpack.c.l.b16 %v1579
  %v1747 = vunpack.c.h.b16 %v1579
  %v1748 = vpack.c.b16 %v1642, %v1640
  %v1749 = vpack.c.b16 %v1643, %v1641
  %v1750 = vpack.c.b16 %v1646, %v1644
  %v1751 = vpack.c.b16 %v1647, %v1645
  %v1752 = vpack.c.b16 %v1650, %v1648
  %v1753 = vpack.c.b16 %v1651, %v1649
  %v1754 = vpack.c.b16 %v1654, %v1652
  %v1755 = vpack.c.b16 %v1655, %v1653
  %v1756 = vpack.c.b16 %v1658, %v1656
  %v1757 = vpack.c.b16 %v1659, %v1657
  %v1758 = vpack.c.b16 %v1662, %v1660
  %v1759 = vpack.c.b16 %v1663, %v1661
  %v1760 = vpack.c.b16 %v1666, %v1664
  %v1761 = vpack.c.b16 %v1667, %v1665
  %v1762 = vpack.c.b16 %v1670, %v1668
  %v1763 = vpack.c.b16 %v1671, %v1669
  %v1764 = vpack.c.b16 %v1674, %v1672
  %v1765 = vpack.c.b16 %v1675, %v1673
  %v1766 = vpack.c.b16 %v1678, %v1676
  %v1767 = vpack.c.b16 %v1679, %v1677
  %v1768 = vpack.c.b16 %v1682, %v1680
  %v1769 = vpack.c.b16 %v1683, %v1681
  %v1770 = vpack.c.b16 %v1686, %v1684
  %v1771 = vpack.c.b16 %v1687, %v1685
  %v1772 = vpack.c.b16 %v1690, %v1688
  %v1773 = vpack.c.b16 %v1691, %v1689
  %v1774 = vpack.c.b16 %v1694, %v1692
  %v1775 = vpack.c.b16 %v1695, %v1693
  %v1776 = vpack.c.b16 %v1698, %v1696
  %v1777 = vpack.c.b16 %v1699, %v1697
  %v1778 = vpack.c.b16 %v1702, %v1700
  %v1779 = vpack.c.b16 %v1703, %v1701
  %v1780 = vpack.c.b16 %v1706, %v1704
  %v1781 = vpack.c.b16 %v1707, %v1705
  %v1782 = vpack.c.b16 %v1710, %v1708
  %v1783 = vpack.c.b16 %v1711, %v1709
  %v1784 = vpack.c.b16 %v1714, %v1712
  %v1785 = vpack.c.b16 %v1715, %v1713
  %v1786 = vpack.c.b16 %v1718, %v1716
  %v1787 = vpack.c.b16 %v1719, %v1717
  %v1788 = vpack.c.b16 %v1722, %v1720
  %v1789 = vpack.c.b16 %v1723, %v1721
  %v1790 = vpack.c.b16 %v1726, %v1724
  %v1791 = vpack.c.b16 %v1727, %v1725
  %v1792 = vpack.c.b16 %v1730, %v1728
  %v1793 = vpack.c.b16 %v1731, %v1729
  %v1794 = vpack.c.b16 %v1734, %v1732
  %v1795 = vpack.c.b16 %v1735, %v1733
  %v1796 = vpack.c.b16 %v1738, %v1736
  %v1797 = vpack.c.b16 %v1739, %v1737
  %v1798 = vpack.c.b16 %v1742, %v1740
  %v1799 = vpack.c.b16 %v1743, %v1741
  %v1800 = vpack.c.b16 %v1746, %v1744
  %v1801 = vpack.c.b16 %v1747, %v1745
  %vm1856 = vcmask 392192
  %v1858 = vsel %vm1856, %v1525, 0
  %1860 = vmatpush.bf16.msra.mxu0 %v1762
  %1861 = vmatpush.bf16.msra.mxu0 %v1760
  %1862 = vmatpush.bf16.msra.mxu0 %v1758
  %1863 = vmatpush.bf16.msra.mxu0 %v1756
  %1864 = vmatpush.bf16.msra.mxu0 %v1754
  %1865 = vmatpush.bf16.msra.mxu0 %v1752
  %1866 = vmatpush.bf16.msra.mxu0 %v1750
  %1867 = vmatpush.bf16.msra.mxu0 %v1748
  %1868 = vmatmul.bf16.gmra.mxu0 %v1522
  %v1869 = vpop.f32.mrf.mxu0
  %v1870 = vadd.f32 %v1582, %v1869
  %v1871 = vpop.f32.mrf.mxu0
  %1872 = vdwg.mxu0
  %1873 = vmatpush.bf16.msra.mxu0 %v1778
  %1874 = vmatpush.bf16.msra.mxu0 %v1776
  %1875 = vmatpush.bf16.msra.mxu0 %v1774
  %1876 = vmatpush.bf16.msra.mxu0 %v1772
  %1877 = vmatpush.bf16.msra.mxu0 %v1770
  %1878 = vmatpush.bf16.msra.mxu0 %v1768
  %1879 = vmatpush.bf16.msra.mxu0 %v1766
  %1880 = vmatpush.bf16.msra.mxu0 %v1764
  %1881 = vmatmul.bf16.gmra.mxu0 %v1523
  %v1882 = vpop.f32.mrf.mxu0
  %v1883 = vadd.f32 %v1870, %v1882
  %v1884 = vpop.f32.mrf.mxu0
  %1885 = vdwg.mxu0
  %1886 = vmatpush.bf16.msra.mxu0 %v1794
  %1887 = vmatpush.bf16.msra.mxu0 %v1792
  %1888 = vmatpush.bf16.msra.mxu0 %v1790
  %1889 = vmatpush.bf16.msra.mxu0 %v1788
  %1890 = vmatpush.bf16.msra.mxu0 %v1786
  %1891 = vmatpush.bf16.msra.mxu0 %v1784
  %1892 = vmatpush.bf16.msra.mxu0 %v1782
  %1893 = vmatpush.bf16.msra.mxu0 %v1780
  %1894 = vmatmul.bf16.gmra.mxu0 %v1524
  %v1895 = vpop.f32.mrf.mxu0
  %v1896 = vadd.f32 %v1883, %v1895
  %v1897 = vpop.f32.mrf.mxu0
  %1898 = vdwg.mxu0
  %1899 = vmatpush.bf16.msra.mxu0 0
  %1900 = vmatpush.bf16.msra.mxu0 0
  %1901 = vmatpush.bf16.msra.mxu0 0
  %1902 = vmatpush.bf16.msra.mxu0 0
  %1903 = vmatpush.bf16.msra.mxu0 0
  %1904 = vmatpush.bf16.msra.mxu0 %v1800
  %1905 = vmatpush.bf16.msra.mxu0 %v1798
  %1906 = vmatpush.bf16.msra.mxu0 %v1796
  %1907 = vmatmul.bf16.gmra.mxu0 %v1858
  %v1908 = vpop.f32.mrf.mxu0
  %v1909 = vadd.f32 %v1896, %v1908
  %v1910 = vpop.f32.mrf.mxu0
  %1911 = vdwg.mxu0
  %1912 = vmatpush.bf16.msra.mxu0 %v1763
  %1913 = vmatpush.bf16.msra.mxu0 %v1761
  %1914 = vmatpush.bf16.msra.mxu0 %v1759
  %1915 = vmatpush.bf16.msra.mxu0 %v1757
  %1916 = vmatpush.bf16.msra.mxu0 %v1755
  %1917 = vmatpush.bf16.msra.mxu0 %v1753
  %1918 = vmatpush.bf16.msra.mxu0 %v1751
  %1919 = vmatpush.bf16.msra.mxu0 %v1749
  %1920 = vmatmul.bf16.gmra.mxu0 %v1522
  %v1921 = vpop.f32.mrf.mxu0
  %v1922 = vadd.f32 %v1583, %v1921
  %v1923 = vpop.f32.mrf.mxu0
  %1924 = vdwg.mxu0
  %1925 = vmatpush.bf16.msra.mxu0 %v1779
  %1926 = vmatpush.bf16.msra.mxu0 %v1777
  %1927 = vmatpush.bf16.msra.mxu0 %v1775
  %1928 = vmatpush.bf16.msra.mxu0 %v1773
  %1929 = vmatpush.bf16.msra.mxu0 %v1771
  %1930 = vmatpush.bf16.msra.mxu0 %v1769
  %1931 = vmatpush.bf16.msra.mxu0 %v1767
  %1932 = vmatpush.bf16.msra.mxu0 %v1765
  %1933 = vmatmul.bf16.gmra.mxu0 %v1523
  %v1934 = vpop.f32.mrf.mxu0
  %v1935 = vadd.f32 %v1922, %v1934
  %v1936 = vpop.f32.mrf.mxu0
  %1937 = vdwg.mxu0
  %1938 = vmatpush.bf16.msra.mxu0 %v1795
  %1939 = vmatpush.bf16.msra.mxu0 %v1793
  %1940 = vmatpush.bf16.msra.mxu0 %v1791
  %1941 = vmatpush.bf16.msra.mxu0 %v1789
  %1942 = vmatpush.bf16.msra.mxu0 %v1787
  %1943 = vmatpush.bf16.msra.mxu0 %v1785
  %1944 = vmatpush.bf16.msra.mxu0 %v1783
  %1945 = vmatpush.bf16.msra.mxu0 %v1781
  %1946 = vmatmul.bf16.gmra.mxu0 %v1524
  %v1947 = vpop.f32.mrf.mxu0
  %v1948 = vadd.f32 %v1935, %v1947
  %v1949 = vpop.f32.mrf.mxu0
  %1950 = vdwg.mxu0
  %1951 = vmatpush.bf16.msra.mxu0 0
  %1952 = vmatpush.bf16.msra.mxu0 0
  %1953 = vmatpush.bf16.msra.mxu0 0
  %1954 = vmatpush.bf16.msra.mxu0 0
  %1955 = vmatpush.bf16.msra.mxu0 0
  %1956 = vmatpush.bf16.msra.mxu0 %v1801
  %1957 = vmatpush.bf16.msra.mxu0 %v1799
  %1958 = vmatpush.bf16.msra.mxu0 %v1797
  %1959 = vmatmul.bf16.gmra.mxu0 %v1858
  %v1960 = vpop.f32.mrf.mxu0
  %v1961 = vadd.f32 %v1948, %v1960
  %v1962 = vpop.f32.mrf.mxu0
  %1963 = vdwg.mxu0
  %v1964 = vmax.f32 %v1909, 0.0
  %v1965 = vmax.f32 %v1961, 0.0
  %v1966 = vpack.c.bf16 %v1964, %v1964
  %v1967 = vpack.c.bf16 %v1965, %v1965
  %v1968 = vld [vmem:[%s7] sm:$0xf]
  %v1969 = vld [vmem:[%s7 + $0x4] sm:$0xf]
  %v1970 = vld [vmem:[%s7 + $0x8] sm:$0xf]
  %v1971 = vld [vmem:[%s7 + $0xc] sm:$0xf]
  %v1972 = vld [vmem:[%s7 + $0x10] sm:$0xf]
  %v1973 = vld [vmem:[%s7 + $0x14] sm:$0xf]
  %v1974 = vld [vmem:[%s7 + $0x18] sm:$0xf]
  %v1975 = vld [vmem:[%s7 + $0x1c] sm:$0xf]
  %v1976 = vld [vmem:[%s7 + $0x20] sm:$0xf]
  %v1977 = vld [vmem:[%s7 + $0x24] sm:$0xf]
  %v1978 = vld [vmem:[%s7 + $0x28] sm:$0xf]
  %v1979 = vld [vmem:[%s7 + $0x2c] sm:$0xf]
  %v1980 = vld [vmem:[%s7 + $0x30] sm:$0xf]
  %v1981 = vld [vmem:[%s7 + $0x34] sm:$0xf]
  %v1982 = vld [vmem:[%s7 + $0x38] sm:$0xf]
  %v1983 = vld [vmem:[%s7 + $0x3c] sm:$0xf]
  %v1984 = vld [vmem:[%s7 + $0x40] sm:$0xf]
  %v1985 = vld [vmem:[%s7 + $0x44] sm:$0xf]
  %v1986 = vld [vmem:[%s7 + $0x48] sm:$0x7]
  %v1987 = vld [vmem:[%s8] sm:$0x1]
  %v1989 = vperm.slane %v1987, 0
  %v2010 = vunpack.c.l.b16 %v1968
  %v2011 = vunpack.c.l.b16 %v1969
  %v2012 = vunpack.c.l.b16 %v1970
  %v2013 = vunpack.c.l.b16 %v1971
  %v2014 = vunpack.c.l.b16 %v1972
  %v2015 = vunpack.c.l.b16 %v1973
  %v2016 = vunpack.c.l.b16 %v1974
  %v2017 = vunpack.c.l.b16 %v1975
  %v2018 = vunpack.c.l.b16 %v1976
  %v2019 = vunpack.c.l.b16 %v1977
  %v2020 = vunpack.c.l.b16 %v1978
  %v2021 = vunpack.c.l.b16 %v1979
  %v2022 = vunpack.c.l.b16 %v1980
  %v2023 = vunpack.c.l.b16 %v1981
  %v2024 = vunpack.c.l.b16 %v1982
  %v2025 = vunpack.c.l.b16 %v1983
  %v2026 = vunpack.c.l.b16 %v1984
  %v2027 = vunpack.c.l.b16 %v1985
  %v2028 = vunpack.c.l.b16 %v1986
  %v2029 = vpack.c.b16 %v2011, %v2010
  %v2030 = vpack.c.b16 %v2013, %v2012
  %v2031 = vpack.c.b16 %v2015, %v2014
  %v2032 = vpack.c.b16 %v2017, %v2016
  %v2033 = vpack.c.b16 %v2019, %v2018
  %v2034 = vpack.c.b16 %v2021, %v2020
  %v2035 = vpack.c.b16 %v2023, %v2022
  %v2036 = vpack.c.b16 %v2025, %v2024
  %v2037 = vpack.c.b16 %v2027, %v2026
  %v2038 = vpack.c.b16 %v2028, %v2028
  %vm2048 = vcmask 179200
  %v2050 = vsel %vm2048, %v1967, 0
  %vm2052 = vcmask 1042432
  %v2054 = vsel %vm2052, %v2038, 0
  %2056 = vmatpush.bf16.msra.mxu0 %v2036
  %2057 = vmatpush.bf16.msra.mxu0 %v2035
  %2058 = vmatpush.bf16.msra.mxu0 %v2034
  %2059 = vmatpush.bf16.msra.mxu0 %v2033
  %2060 = vmatpush.bf16.msra.mxu0 %v2032
  %2061 = vmatpush.bf16.msra.mxu0 %v2031
  %2062 = vmatpush.bf16.msra.mxu0 %v2030
  %2063 = vmatpush.bf16.msra.mxu0 %v2029
  %2064 = vmatmul.bf16.gmra.mxu0 %v1966
  %v2065 = vpop.f32.mrf.mxu0
  %v2066 = vadd.f32 %v1989, %v2065
  %v2067 = vpop.f32.mrf.mxu0
  %2068 = vdwg.mxu0
  %2069 = vmatpush.bf16.msra.mxu0 0
  %2070 = vmatpush.bf16.msra.mxu0 0
  %2071 = vmatpush.bf16.msra.mxu0 0
  %2072 = vmatpush.bf16.msra.mxu0 0
  %2073 = vmatpush.bf16.msra.mxu0 0
  %2074 = vmatpush.bf16.msra.mxu0 0
  %2075 = vmatpush.bf16.msra.mxu0 %v2054
  %2076 = vmatpush.bf16.msra.mxu0 %v2037
  %2077 = vmatmul.bf16.gmra.mxu0 %v2050
  %v2078 = vpop.f32.mrf.mxu0
  %v2079 = vadd.f32 %v2066, %v2078
  %v2080 = vpop.f32.mrf.mxu0
  %2081 = vdwg.mxu0
  %v2082 = vmax.f32 %v2079, 0.0
  %v2083 = vpack.c.bf16 %v2082, %v2082
  %v2084 = vld [vmem:[%s9] sm:$0xf]
  %v2085 = vld [vmem:[%s9 + $0x4] sm:$0xf]
  %v2086 = vld [vmem:[%s9 + $0x8] sm:$0xf]
  %v2087 = vld [vmem:[%s9 + $0xc] sm:$0xf]
  %v2088 = vld [vmem:[%s9 + $0x10] sm:$0xf]
  %v2089 = vld [vmem:[%s9 + $0x14] sm:$0xf]
  %v2090 = vld [vmem:[%s9 + $0x18] sm:$0x1]
  %v2091 = vld [vmem:[%s10] sm:$0x1]
  %v2093 = vperm.slane %v2091, 0
  %v2102 = vunpack.c.l.b16 %v2084
  %v2103 = vunpack.c.l.b16 %v2085
  %v2104 = vunpack.c.l.b16 %v2086
  %v2105 = vunpack.c.l.b16 %v2087
  %v2106 = vunpack.c.l.b16 %v2088
  %v2107 = vunpack.c.l.b16 %v2089
  %v2108 = vunpack.c.l.b16 %v2090
  %v2109 = vpack.c.b16 %v2103, %v2102
  %v2110 = vpack.c.b16 %v2105, %v2104
  %v2111 = vpack.c.b16 %v2107, %v2106
  %v2112 = vpack.c.b16 %v2108, %v2108
  %vm2116 = vcmask 408576
  %v2118 = vsel %vm2116, %v2083, 0
  %vm2120 = vcmask 1040384
  %v2122 = vsel %vm2120, %v2112, 0
  %2124 = vmatpush.bf16.msra.mxu0 0
  %2125 = vmatpush.bf16.msra.mxu0 0
  %2126 = vmatpush.bf16.msra.mxu0 0
  %2127 = vmatpush.bf16.msra.mxu0 0
  %2128 = vmatpush.bf16.msra.mxu0 %v2122
  %2129 = vmatpush.bf16.msra.mxu0 %v2111
  %2130 = vmatpush.bf16.msra.mxu0 %v2110
  %2131 = vmatpush.bf16.msra.mxu0 %v2109
  %2132 = vmatmul.bf16.gmra.mxu0 %v2118
  %v2133 = vpop.f32.mrf.mxu0
  %v2134 = vadd.f32 %v2093, %v2133
  %v2135 = vpop.f32.mrf.mxu0
  %2136 = vdwg.mxu0
  %2137 = vst [vmem:[%s11] sm:$0xff] %v2134
  // Predicated region
  $region46: #{incept_conv_forward.1} parent=0 // pred_check
    _
  $region47: #{incept_conv_forward.1} parent=0 // pred_check_branch
    %2139 = sbr.rel (0) target = $region49
  $region48: #{incept_conv_forward.1} parent=0 // pred_region
    _
  $region49: #{incept_conv_forward.1} parent=0 // pred_fallthru
    _
  // Predicated region
  $region50: #{incept_conv_forward.1} parent=0 // pred_check
    _
  $region51: #{incept_conv_forward.1} parent=0 // pred_check_branch
    %2141 = sbr.rel (0) target = $region53
  $region52: #{incept_conv_forward.1} parent=0 // pred_region
    _
  $region53: #{incept_conv_forward.1} parent=0 // pred_fallthru
    _

</llo_original>
